<compile_context>
chip_gen: v7x
topology: tpu7x:2x2x1
jax: 0.10.0
libtpu: 0.0.40
codegen_flags: <defaults>
</compile_context>

<pallas_src>
import functools

import jax
import jax.numpy as jnp
from jax.experimental import pallas as pl
from jax.experimental.pallas import tpu as pltpu

_HALO = 128  # one 128-lane block of halo on each side of a seq tile (covers (k-1)//2 <= 128)


def _round_up(n, m):
    return -(-n // m) * m


def _auto_seq_tile(in_ch, bneck, growth, k, seq_len, budget_bytes=12 << 20):
    """Largest 128-multiple seq tile whose per-grid-step footprint fits `budget_bytes`.

    Budget kept <= ~12 MiB so the (double-buffered) pipeline stays well inside v7x's
    64 MiB per-TC VMEM; v5e/v6e (128 MiB) could go higher but 2048 columns already
    amortizes halo overhead to ~12%.
    """
    out_ch = in_ch + growth
    # f32 bytes per *center* column live in one grid step:
    #   x center (dbuf) + out (dbuf) + h + z + a(f32+bf16) + p + y
    per_col = 4 * (3 * in_ch + 2 * out_ch + 3 * bneck + (k + 1) * growth)
    # fixed bytes independent of tile size: halo blocks + halo-width intermediates + weights
    fixed = (4 * 2 * _HALO * (5 * in_ch + 3 * bneck + k * growth)
             + 2 * 2 * (bneck * in_ch + k * growth * bneck)
             + 4 * 4 * (in_ch + bneck))
    tile = (max(budget_bytes - fixed, 0) // per_col) // 128 * 128
    tile = max(512, min(tile, 2048))
    return int(max(128, min(tile, _round_up(seq_len, 128))))


def _dense_bottleneck_kernel(xc_ref, xl_ref, xr_ref, s1_ref, b1_ref, w1_ref,
                             s2_ref, b2_ref, w2_ref, out_ref, *,
                             seq_len, seq_tile, k, growth, in_ch):
    # xc_ref : (1, in_ch, seq_tile)        center x block   (global cols [l*T, (l+1)*T))
    # xl_ref : (1, in_ch, 128)             left-halo block  (cols [l*T-128, l*T)); junk at l==0
    # xr_ref : (1, in_ch, 128)             right-halo block (cols [(l+1)*T, (l+1)*T+128)); junk at edge
    # s1/b1  : (in_ch, 1)                  folded BN affine of neck_conv      (f32)
    # w1     : (bneck, in_ch)              1x1 conv weight                    (bf16)
    # s2/b2  : (bneck, 1)                  folded BN affine of main_conv      (f32)
    # w2     : (k*growth, bneck)           tap-major stacked K-tap conv weight (bf16)
    # out    : (1, in_ch+growth, seq_tile) full concat tile: [x pass-through ; new features]
    l = pl.program_id(1)
    pad = (k - 1) // 2

    s1 = s1_ref[...]; b1 = b1_ref[...]
    s2 = s2_ref[...]; b2 = b2_ref[...]
    w1 = w1_ref[...]; w2 = w2_ref[...]

    # ---- neck: BN -> ReLU -> 1x1 conv, run per piece (no (in_ch, W) window concat) ----
    def neck(xp):
        h = jnp.maximum(xp * s1 + b1, 0.0)
        return jnp.dot(w1, h.astype(w1.dtype), preferred_element_type=jnp.float32)

    z_c = neck(xc_ref[0])                                    # (bneck, seq_tile)
    z_l = neck(xl_ref[0])                                    # (bneck, 128)
    z_r = neck(xr_ref[0])                                    # (bneck, 128)

    # ---- main BN -> ReLU, zero every column outside the true sequence ----
    # (exact 'same' zero padding: the BN shift of out-of-range columns must not leak
    #  into the conv; halo pieces are always masked, the center mask only bites in the
    #  last, possibly partial tile but is a single cheap VPU pass.)
    def bn2(z, gcol):
        a = jnp.maximum(z * s2 + b2, 0.0)
        return jnp.where((gcol >= 0) & (gcol < seq_len), a, 0.0)

    col_h = jax.lax.broadcasted_iota(jnp.int32, (1, _HALO), 1)
    col_c = jax.lax.broadcasted_iota(jnp.int32, (1, seq_tile), 1)
    a_l = bn2(z_l, l * seq_tile - _HALO + col_h)
    a_c = bn2(z_c, l * seq_tile + col_c)
    a_r = bn2(z_r, (l + 1) * seq_tile + col_h)

    # contiguous (bneck, W) buffer for the K-tap matmul (cheaper than concatenating x)
    a = jnp.concatenate([a_l, a_c, a_r], axis=-1)            # (bneck, seq_tile + 256)

    # ---- K-tap conv as ONE fused MXU matmul over all taps ----
    p = jnp.dot(w2, a.astype(w2.dtype),
                preferred_element_type=jnp.float32)           # (k*growth, W)

    # Combine taps: center tap is a lane-aligned zero-cost view, the other k-1 taps are
    # +/-pad lane-shifted slabs (XLU lane-rotate); k is small & static -> unrolled.
    y = p[pad * growth:(pad + 1) * growth, _HALO:_HALO + seq_tile]
    for tap in range(k):
        if tap == pad:
            continue
        start = _HALO - pad + tap
        y = y + p[tap * growth:(tap + 1) * growth, start:start + seq_tile]

    # ---- in-kernel concat: x pass-through rows + new-feature rows (lane-dense stores) ----
    out_ref[0, :in_ch, :] = xc_ref[0].astype(out_ref.dtype)
    out_ref[0, in_ch:in_ch + growth, :] = y.astype(out_ref.dtype)


def dense_bottleneck(x, kparams, *, in_ch, growth, bn_size, filter_length, seq_tile=None):
    """DenseBottleNeck forward. x: (B, in_ch, L) f32 -> (B, in_ch + growth, L) f32."""
    b, c, seq_len = x.shape
    assert c == in_ch
    assert filter_length % 2 == 1, "only odd filter_length ('same' padding) is supported"
    bneck = bn_size * growth
    pad = (filter_length - 1) // 2
    assert pad <= _HALO

    s1, b1, w1, s2, b2, w2s = kparams
    assert w1.shape == (bneck, in_ch)
    assert w2s.shape == (filter_length * growth, bneck)

    if seq_tile is None:
        seq_tile = _auto_seq_tile(in_ch, bneck, growth, filter_length, seq_len)
    assert seq_tile % 128 == 0

    n_l = pl.cdiv(seq_len, seq_tile)   # seq tiles; last one may be partial (masked writeback)
    bpt = seq_tile // _HALO            # 128-lane blocks per seq tile
    n_blk = pl.cdiv(seq_len, _HALO)    # 128-lane blocks along the sequence

    kernel = functools.partial(
        _dense_bottleneck_kernel,
        seq_len=seq_len, seq_tile=seq_tile, k=filter_length, growth=growth, in_ch=in_ch)

    const = lambda shape: pl.BlockSpec(shape, lambda i, l: (0,) * len(shape))

    itemsize = x.dtype.itemsize
    return pl.pallas_call(
        kernel,
        out_shape=jax.ShapeDtypeStruct((b, in_ch + growth, seq_len), x.dtype),
        grid_spec=pltpu.PrefetchScalarGridSpec(
            num_scalar_prefetch=0,
            grid=(b, n_l),
            in_specs=[
                # center tile of x
                pl.BlockSpec((1, in_ch, seq_tile), lambda i, l: (i, 0, l)),
                # 128-lane left / right halo blocks of the same array (halo recompute);
                # clamped indices fetch junk at the sequence edges, which the in-kernel
                # gcol mask zeroes out (exactly the 'same'-padding zeros).
                pl.BlockSpec((1, in_ch, _HALO),
                             lambda i, l: (i, 0, jnp.maximum(l * bpt - 1, 0))),
                pl.BlockSpec((1, in_ch, _HALO),
                             lambda i, l: (i, 0, jnp.minimum((l + 1) * bpt, n_blk - 1))),
                const((in_ch, 1)), const((in_ch, 1)),
                const((bneck, in_ch)),
                const((bneck, 1)), const((bneck, 1)),
                const((filter_length * growth, bneck)),
            ],
            # full concat tile: channel block equals the full (in_ch+growth) dim
            out_specs=pl.BlockSpec((1, in_ch + growth, seq_tile), lambda i, l: (i, 0, l)),
        ),
        compiler_params=pltpu.CompilerParams(
            dimension_semantics=("parallel", "parallel"),
            vmem_limit_bytes=32 * 1024 * 1024,
        ),
        cost_estimate=pl.CostEstimate(
            flops=2 * b * n_l * (seq_tile + 2 * _HALO) * bneck
                  * (in_ch + filter_length * growth),
            transcendentals=0,
            bytes_accessed=itemsize * b * in_ch * n_l * (seq_tile + 2 * _HALO)   # x + halo re-reads
                           + itemsize * b * (in_ch + growth) * n_l * seq_tile    # concat output
                           + int(w1.size) * 2 + int(w2s.size) * 2                # bf16 weights
                           + 4 * 2 * (in_ch + bneck),                            # BN affines
        ),
    )(x, x, x, s1, b1, w1, s2, b2, w2s)


def make_params(key, *, in_ch, growth, bn_size, filter_length):
    """Deterministic synthetic parameters, BN running stats folded into scale/shift (f32)."""
    bneck = bn_size * growth
    ks = jax.random.split(key, 10)
    eps = 1e-5

    def bn_affine(kg, kb, km, kv, ch):
        gamma = jax.random.normal(kg, (ch,)) * 0.1 + 1.0
        beta = jax.random.normal(kb, (ch,)) * 0.1
        mean = jax.random.normal(km, (ch,)) * 0.1
        var = jax.random.uniform(kv, (ch,), minval=0.5, maxval=1.5)
        scale = gamma / jnp.sqrt(var + eps)
        shift = beta - mean * scale
        return (scale.reshape(ch, 1).astype(jnp.float32),
                shift.reshape(ch, 1).astype(jnp.float32))

    s1, b1 = bn_affine(ks[0], ks[1], ks[2], ks[3], in_ch)
    s2, b2 = bn_affine(ks[4], ks[5], ks[6], ks[7], bneck)
    w1 = (jax.random.normal(ks[8], (bneck, in_ch)) * 0.1).astype(jnp.float32)
    # PyTorch Conv1d layout (out, in, k) = (growth, bneck, k)
    w2 = (jax.random.normal(ks[9], (growth, bneck, filter_length)) * 0.1).astype(jnp.float32)
    return (s1, b1, w1, s2, b2, w2)


def kernel_params(params):
    """One-time transform into the kernel's MXU-ready layout (bf16 matmul operands)."""
    s1, b1, w1, s2, b2, w2 = params
    growth, bneck, k = w2.shape
    # tap-major stack: (growth, bneck, k) -> (k, growth, bneck) -> (k*growth, bneck)
    w2s = jnp.transpose(w2, (2, 0, 1)).reshape(k * growth, bneck)
    return (s1, b1, w1.astype(jnp.bfloat16), s2, b2, w2s.astype(jnp.bfloat16))


def ref_forward(x, params, *, filter_length):
    """Pure-JAX f32 reference of the same forward pass (for the correctness check)."""
    s1, b1, w1, s2, b2, w2 = params
    seq_len = x.shape[-1]
    h = jnp.maximum(x * s1[None] + b1[None], 0.0)
    z = jnp.einsum('oc,bcl->bol', w1, h)
    a = jnp.maximum(z * s2[None] + b2[None], 0.0)
    pad = (filter_length - 1) // 2
    a_pad = jnp.pad(a, ((0, 0), (0, 0), (pad, pad)))
    y = sum(jnp.einsum('oc,bcl->bol', w2[:, :, t], a_pad[..., t:t + seq_len])
            for t in range(filter_length))
    return jnp.concatenate([x, y], axis=1)


def _run_case(key, *, b, in_ch, seq_len, growth, bn_size, k, seq_tile):
    kx, kp = jax.random.split(key)
    x = jax.random.normal(kx, (b, in_ch, seq_len), dtype=jnp.float32)
    params = make_params(kp, in_ch=in_ch, growth=growth, bn_size=bn_size, filter_length=k)
    kparams = kernel_params(params)

    out = dense_bottleneck(x, kparams, in_ch=in_ch, growth=growth, bn_size=bn_size,
                           filter_length=k, seq_tile=seq_tile)
    out = jax.block_until_ready(out)

    ref = ref_forward(x, params, filter_length=k)
    assert out.shape == (b, in_ch + growth, seq_len), out.shape
    max_err = float(jnp.max(jnp.abs(out - ref)))
    assert jnp.allclose(out, ref, atol=2e-2, rtol=2e-2), f"mismatch vs reference, max_err={max_err}"


if __name__ == "__main__":
    key = jax.random.PRNGKey(0)
    k1, k2 = jax.random.split(key)

    # Case 1: L=300 with seq_tile=256 -> two seq tiles, a real interior halo, both clamped
    # edge halos and a partial (masked-writeback) last tile.
    _run_case(k1, b=2, in_ch=16, seq_len=300, growth=8, bn_size=4, k=3, seq_tile=256)

    # Case 2: auto tile selection, larger filter (k=7), single tile with both halos clamped.
    _run_case(k2, b=1, in_ch=24, seq_len=512, growth=8, bn_size=2, k=7, seq_tile=None)

    print("KERNEL_OK")
</pallas_src>

<mosaic_0001>
module attributes {stable_mosaic.version = 11 : i64} {
  func.func @_dense_bottleneck_kernel(%arg0: i32, %arg1: i32, %arg2: memref<1x16x256xf32, #tpu.memory_space<vmem>>, %arg3: memref<1x16x128xf32, #tpu.memory_space<vmem>>, %arg4: memref<1x16x128xf32, #tpu.memory_space<vmem>>, %arg5: memref<16x1xf32, #tpu.memory_space<vmem>>, %arg6: memref<16x1xf32, #tpu.memory_space<vmem>>, %arg7: memref<32x16xbf16, #tpu.memory_space<vmem>>, %arg8: memref<32x1xf32, #tpu.memory_space<vmem>>, %arg9: memref<32x1xf32, #tpu.memory_space<vmem>>, %arg10: memref<24x32xbf16, #tpu.memory_space<vmem>>, %arg11: memref<1x24x256xf32, #tpu.memory_space<vmem>>) attributes {dimension_semantics = [#tpu.dimension_semantics<parallel>, #tpu.dimension_semantics<parallel>], iteration_bounds = array<i64: 2, 2>, scalar_prefetch = 0 : i64, scratch_operands = 0 : i64, tpu.core_type = #tpu.core_type<tc>, window_params = [{transform_indices = @transform_0, window_bounds = array<i64: 1, 16, 256>}, {transform_indices = @transform_1, window_bounds = array<i64: 1, 16, 128>}, {transform_indices = @transform_2, window_bounds = array<i64: 1, 16, 128>}, {pipeline_mode = #tpu.pipeline_mode<synchronous>, transform_indices = @transform_3, window_bounds = array<i64: 16, 1>}, {pipeline_mode = #tpu.pipeline_mode<synchronous>, transform_indices = @transform_4, window_bounds = array<i64: 16, 1>}, {pipeline_mode = #tpu.pipeline_mode<synchronous>, transform_indices = @transform_5, window_bounds = array<i64: 32, 16>}, {pipeline_mode = #tpu.pipeline_mode<synchronous>, transform_indices = @transform_6, window_bounds = array<i64: 32, 1>}, {pipeline_mode = #tpu.pipeline_mode<synchronous>, transform_indices = @transform_7, window_bounds = array<i64: 32, 1>}, {pipeline_mode = #tpu.pipeline_mode<synchronous>, transform_indices = @transform_8, window_bounds = array<i64: 24, 32>}, {transform_indices = @transform_9, window_bounds = array<i64: 1, 24, 256>}]} {
    %c0 = arith.constant 0 : index
    %c0_0 = arith.constant 0 : index
    %0 = vector.load %arg5[%c0, %c0_0] : memref<16x1xf32, #tpu.memory_space<vmem>>, vector<16x1xf32>
    %c0_1 = arith.constant 0 : index
    %c0_2 = arith.constant 0 : index
    %1 = vector.load %arg6[%c0_1, %c0_2] : memref<16x1xf32, #tpu.memory_space<vmem>>, vector<16x1xf32>
    %c0_3 = arith.constant 0 : index
    %c0_4 = arith.constant 0 : index
    %2 = vector.load %arg8[%c0_3, %c0_4] : memref<32x1xf32, #tpu.memory_space<vmem>>, vector<32x1xf32>
    %c0_5 = arith.constant 0 : index
    %c0_6 = arith.constant 0 : index
    %3 = vector.load %arg9[%c0_5, %c0_6] : memref<32x1xf32, #tpu.memory_space<vmem>>, vector<32x1xf32>
    %c0_7 = arith.constant 0 : index
    %c0_8 = arith.constant 0 : index
    %4 = vector.load %arg7[%c0_7, %c0_8] : memref<32x16xbf16, #tpu.memory_space<vmem>>, vector<32x16xbf16>
    %c0_9 = arith.constant 0 : index
    %c0_10 = arith.constant 0 : index
    %5 = vector.load %arg10[%c0_9, %c0_10] : memref<24x32xbf16, #tpu.memory_space<vmem>>, vector<24x32xbf16>
    %c0_11 = arith.constant 0 : index
    %c0_12 = arith.constant 0 : index
    %c0_13 = arith.constant 0 : index
    %6 = vector.load %arg2[%c0_11, %c0_12, %c0_13] : memref<1x16x256xf32, #tpu.memory_space<vmem>>, vector<1x16x256xf32>
    %7 = vector.shape_cast %6 : vector<1x16x256xf32> to vector<16x256xf32>
    %8 = vector.broadcast %0 : vector<16x1xf32> to vector<16x256xf32>
    %9 = arith.mulf %7, %8 : vector<16x256xf32>
    %10 = vector.broadcast %1 : vector<16x1xf32> to vector<16x256xf32>
    %11 = arith.addf %9, %10 : vector<16x256xf32>
    %cst = arith.constant 0.000000e+00 : f32
    %12 = vector.broadcast %cst : f32 to vector<16x256xf32>
    %13 = arith.maximumf %11, %12 : vector<16x256xf32>
    %14 = arith.truncf %13 : vector<16x256xf32> to vector<16x256xbf16>
    %cst_14 = arith.constant dense<0.000000e+00> : vector<32x256xf32>
    %15 = tpu.matmul %4, %14, %cst_14 {dimension_numbers = #tpu.dot_dimension_numbers<[1], [0], [0], [1], [0, 0, 1, 1], [], []>} : vector<32x16xbf16>, vector<16x256xbf16>, vector<32x256xf32> -> vector<32x256xf32>
    %c0_15 = arith.constant 0 : index
    %c0_16 = arith.constant 0 : index
    %c0_17 = arith.constant 0 : index
    %16 = vector.load %arg3[%c0_15, %c0_16, %c0_17] : memref<1x16x128xf32, #tpu.memory_space<vmem>>, vector<1x16x128xf32>
    %17 = vector.shape_cast %16 : vector<1x16x128xf32> to vector<16x128xf32>
    %18 = vector.broadcast %0 : vector<16x1xf32> to vector<16x128xf32>
    %19 = arith.mulf %17, %18 : vector<16x128xf32>
    %20 = vector.broadcast %1 : vector<16x1xf32> to vector<16x128xf32>
    %21 = arith.addf %19, %20 : vector<16x128xf32>
    %cst_18 = arith.constant 0.000000e+00 : f32
    %22 = vector.broadcast %cst_18 : f32 to vector<16x128xf32>
    %23 = arith.maximumf %21, %22 : vector<16x128xf32>
    %24 = arith.truncf %23 : vector<16x128xf32> to vector<16x128xbf16>
    %cst_19 = arith.constant dense<0.000000e+00> : vector<32x128xf32>
    %25 = tpu.matmul %4, %24, %cst_19 {dimension_numbers = #tpu.dot_dimension_numbers<[1], [0], [0], [1], [0, 0, 1, 1], [], []>} : vector<32x16xbf16>, vector<16x128xbf16>, vector<32x128xf32> -> vector<32x128xf32>
    %c0_20 = arith.constant 0 : index
    %c0_21 = arith.constant 0 : index
    %c0_22 = arith.constant 0 : index
    %26 = vector.load %arg4[%c0_20, %c0_21, %c0_22] : memref<1x16x128xf32, #tpu.memory_space<vmem>>, vector<1x16x128xf32>
    %27 = vector.shape_cast %26 : vector<1x16x128xf32> to vector<16x128xf32>
    %28 = vector.broadcast %0 : vector<16x1xf32> to vector<16x128xf32>
    %29 = arith.mulf %27, %28 : vector<16x128xf32>
    %30 = vector.broadcast %1 : vector<16x1xf32> to vector<16x128xf32>
    %31 = arith.addf %29, %30 : vector<16x128xf32>
    %cst_23 = arith.constant 0.000000e+00 : f32
    %32 = vector.broadcast %cst_23 : f32 to vector<16x128xf32>
    %33 = arith.maximumf %31, %32 : vector<16x128xf32>
    %34 = arith.truncf %33 : vector<16x128xf32> to vector<16x128xbf16>
    %cst_24 = arith.constant dense<0.000000e+00> : vector<32x128xf32>
    %35 = tpu.matmul %4, %34, %cst_24 {dimension_numbers = #tpu.dot_dimension_numbers<[1], [0], [0], [1], [0, 0, 1, 1], [], []>} : vector<32x16xbf16>, vector<16x128xbf16>, vector<32x128xf32> -> vector<32x128xf32>
    %36 = tpu.iota {dimensions = array<i32: 1>} : vector<1x128xi32>
    %37 = tpu.iota {dimensions = array<i32: 1>} : vector<1x256xi32>
    %c256_i32 = arith.constant 256 : i32
    %38 = arith.muli %arg1, %c256_i32 : i32
    %c128_i32 = arith.constant 128 : i32
    %39 = arith.subi %38, %c128_i32 : i32
    %40 = vector.broadcast %39 : i32 to vector<1x128xi32>
    %41 = arith.addi %40, %36 : vector<1x128xi32>
    %42 = vector.broadcast %2 : vector<32x1xf32> to vector<32x128xf32>
    %43 = arith.mulf %25, %42 : vector<32x128xf32>
    %44 = vector.broadcast %3 : vector<32x1xf32> to vector<32x128xf32>
    %45 = arith.addf %43, %44 : vector<32x128xf32>
    %cst_25 = arith.constant 0.000000e+00 : f32
    %46 = vector.broadcast %cst_25 : f32 to vector<32x128xf32>
    %47 = arith.maximumf %45, %46 : vector<32x128xf32>
    %c0_i32 = arith.constant 0 : i32
    %48 = vector.broadcast %c0_i32 : i32 to vector<1x128xi32>
    %49 = arith.cmpi sge, %41, %48 : vector<1x128xi32>
    %c300_i32 = arith.constant 300 : i32
    %50 = vector.broadcast %c300_i32 : i32 to vector<1x128xi32>
    %51 = arith.cmpi slt, %41, %50 : vector<1x128xi32>
    %52 = arith.andi %49, %51 : vector<1x128xi1>
    %cst_26 = arith.constant 0.000000e+00 : f32
    %53 = vector.shape_cast %52 : vector<1x128xi1> to vector<1x128xi1>
    %54 = vector.broadcast %53 : vector<1x128xi1> to vector<32x128xi1>
    %55 = vector.broadcast %cst_26 : f32 to vector<32x128xf32>
    %56 = arith.select %54, %47, %55 : vector<32x128xi1>, vector<32x128xf32>
    %c256_i32_27 = arith.constant 256 : i32
    %57 = arith.muli %arg1, %c256_i32_27 : i32
    %58 = vector.broadcast %57 : i32 to vector<1x256xi32>
    %59 = arith.addi %58, %37 : vector<1x256xi32>
    %60 = vector.broadcast %2 : vector<32x1xf32> to vector<32x256xf32>
    %61 = arith.mulf %15, %60 : vector<32x256xf32>
    %62 = vector.broadcast %3 : vector<32x1xf32> to vector<32x256xf32>
    %63 = arith.addf %61, %62 : vector<32x256xf32>
    %cst_28 = arith.constant 0.000000e+00 : f32
    %64 = vector.broadcast %cst_28 : f32 to vector<32x256xf32>
    %65 = arith.maximumf %63, %64 : vector<32x256xf32>
    %c0_i32_29 = arith.constant 0 : i32
    %66 = vector.broadcast %c0_i32_29 : i32 to vector<1x256xi32>
    %67 = arith.cmpi sge, %59, %66 : vector<1x256xi32>
    %c300_i32_30 = arith.constant 300 : i32
    %68 = vector.broadcast %c300_i32_30 : i32 to vector<1x256xi32>
    %69 = arith.cmpi slt, %59, %68 : vector<1x256xi32>
    %70 = arith.andi %67, %69 : vector<1x256xi1>
    %cst_31 = arith.constant 0.000000e+00 : f32
    %71 = vector.shape_cast %70 : vector<1x256xi1> to vector<1x256xi1>
    %72 = vector.broadcast %71 : vector<1x256xi1> to vector<32x256xi1>
    %73 = vector.broadcast %cst_31 : f32 to vector<32x256xf32>
    %74 = arith.select %72, %65, %73 : vector<32x256xi1>, vector<32x256xf32>
    %c1_i32 = arith.constant 1 : i32
    %75 = arith.addi %arg1, %c1_i32 : i32
    %c256_i32_32 = arith.constant 256 : i32
    %76 = arith.muli %75, %c256_i32_32 : i32
    %77 = vector.broadcast %76 : i32 to vector<1x128xi32>
    %78 = arith.addi %77, %36 : vector<1x128xi32>
    %79 = vector.broadcast %2 : vector<32x1xf32> to vector<32x128xf32>
    %80 = arith.mulf %35, %79 : vector<32x128xf32>
    %81 = vector.broadcast %3 : vector<32x1xf32> to vector<32x128xf32>
    %82 = arith.addf %80, %81 : vector<32x128xf32>
    %cst_33 = arith.constant 0.000000e+00 : f32
    %83 = vector.broadcast %cst_33 : f32 to vector<32x128xf32>
    %84 = arith.maximumf %82, %83 : vector<32x128xf32>
    %c0_i32_34 = arith.constant 0 : i32
    %85 = vector.broadcast %c0_i32_34 : i32 to vector<1x128xi32>
    %86 = arith.cmpi sge, %78, %85 : vector<1x128xi32>
    %c300_i32_35 = arith.constant 300 : i32
    %87 = vector.broadcast %c300_i32_35 : i32 to vector<1x128xi32>
    %88 = arith.cmpi slt, %78, %87 : vector<1x128xi32>
    %89 = arith.andi %86, %88 : vector<1x128xi1>
    %cst_36 = arith.constant 0.000000e+00 : f32
    %90 = vector.shape_cast %89 : vector<1x128xi1> to vector<1x128xi1>
    %91 = vector.broadcast %90 : vector<1x128xi1> to vector<32x128xi1>
    %92 = vector.broadcast %cst_36 : f32 to vector<32x128xf32>
    %93 = arith.select %91, %84, %92 : vector<32x128xi1>, vector<32x128xf32>
    %94 = tpu.concatenate %56, %74, %93 in 1 : vector<32x128xf32>, vector<32x256xf32>, vector<32x128xf32> -> vector<32x512xf32>
    %95 = arith.truncf %94 : vector<32x512xf32> to vector<32x512xbf16>
    %cst_37 = arith.constant dense<0.000000e+00> : vector<24x512xf32>
    %96 = tpu.matmul %5, %95, %cst_37 {dimension_numbers = #tpu.dot_dimension_numbers<[1], [0], [0], [1], [0, 0, 1, 1], [], []>} : vector<24x32xbf16>, vector<32x512xbf16>, vector<24x512xf32> -> vector<24x512xf32>
    %97 = vector.extract_strided_slice %96 {offsets = [8, 128], sizes = [8, 256], strides = [1, 1]} : vector<24x512xf32> to vector<8x256xf32>
    %98 = vector.extract_strided_slice %96 {offsets = [0, 127], sizes = [8, 256], strides = [1, 1]} : vector<24x512xf32> to vector<8x256xf32>
    %99 = arith.addf %97, %98 : vector<8x256xf32>
    %100 = vector.extract_strided_slice %96 {offsets = [16, 129], sizes = [8, 256], strides = [1, 1]} : vector<24x512xf32> to vector<8x256xf32>
    %101 = arith.addf %99, %100 : vector<8x256xf32>
    %c0_38 = arith.constant 0 : index
    %c0_39 = arith.constant 0 : index
    %c0_40 = arith.constant 0 : index
    %102 = vector.load %arg2[%c0_38, %c0_39, %c0_40] : memref<1x16x256xf32, #tpu.memory_space<vmem>>, vector<1x16x256xf32>
    %103 = vector.shape_cast %102 : vector<1x16x256xf32> to vector<16x256xf32>
    %c0_41 = arith.constant 0 : index
    %c0_42 = arith.constant 0 : index
    %c0_43 = arith.constant 0 : index
    %104 = vector.load %arg11[%c0_41, %c0_42, %c0_43] : memref<1x24x256xf32, #tpu.memory_space<vmem>>, vector<1x16x256xf32>
    %105 = vector.shape_cast %104 : vector<1x16x256xf32> to vector<16x256xf32>
    %106 = vector.shape_cast %103 : vector<16x256xf32> to vector<1x16x256xf32>
    tpu.vector_store %arg11[%c0_41, %c0_42, %c0_43], %106 {strides = array<i32>} : memref<1x24x256xf32, #tpu.memory_space<vmem>>, vector<1x16x256xf32>,
    %c0_44 = arith.constant 0 : index
    %c16 = arith.constant 16 : index
    %c0_45 = arith.constant 0 : index
    %107 = vector.load %arg11[%c0_44, %c16, %c0_45] : memref<1x24x256xf32, #tpu.memory_space<vmem>>, vector<1x8x256xf32>
    %108 = vector.shape_cast %107 : vector<1x8x256xf32> to vector<8x256xf32>
    %109 = vector.shape_cast %101 : vector<8x256xf32> to vector<1x8x256xf32>
    tpu.vector_store %arg11[%c0_44, %c16, %c0_45], %109 {strides = array<i32>} : memref<1x24x256xf32, #tpu.memory_space<vmem>>, vector<1x8x256xf32>,
    return
  }
  func.func @transform_0(%arg0: i32, %arg1: i32) -> (i32, i32, i32) {
    %c0_i32 = arith.constant 0 : i32
    %c0_i32_0 = arith.constant 0 : i32
    return %arg0, %c0_i32, %arg1 : i32, i32, i32
  }
  func.func @transform_1(%arg0: i32, %arg1: i32) -> (i32, i32, i32) {
    %c2_i32 = arith.constant 2 : i32
    %0 = arith.muli %arg1, %c2_i32 : i32
    %c1_i32 = arith.constant 1 : i32
    %1 = arith.subi %0, %c1_i32 : i32
    %c0_i32 = arith.constant 0 : i32
    %2 = arith.maxsi %1, %c0_i32 : i32
    %c0_i32_0 = arith.constant 0 : i32
    %c0_i32_1 = arith.constant 0 : i32
    return %arg0, %c0_i32_0, %2 : i32, i32, i32
  }
  func.func @transform_2(%arg0: i32, %arg1: i32) -> (i32, i32, i32) {
    %c1_i32 = arith.constant 1 : i32
    %0 = arith.addi %arg1, %c1_i32 : i32
    %c2_i32 = arith.constant 2 : i32
    %1 = arith.muli %0, %c2_i32 : i32
    %c2_i32_0 = arith.constant 2 : i32
    %2 = arith.minsi %1, %c2_i32_0 : i32
    %c0_i32 = arith.constant 0 : i32
    %c0_i32_1 = arith.constant 0 : i32
    return %arg0, %c0_i32, %2 : i32, i32, i32
  }
  func.func @transform_3(%arg0: i32, %arg1: i32) -> (i32, i32) {
    %c0_i32 = arith.constant 0 : i32
    %c0_i32_0 = arith.constant 0 : i32
    %c0_i32_1 = arith.constant 0 : i32
    return %c0_i32, %c0_i32_0 : i32, i32
  }
  func.func @transform_4(%arg0: i32, %arg1: i32) -> (i32, i32) {
    %c0_i32 = arith.constant 0 : i32
    %c0_i32_0 = arith.constant 0 : i32
    %c0_i32_1 = arith.constant 0 : i32
    return %c0_i32, %c0_i32_0 : i32, i32
  }
  func.func @transform_5(%arg0: i32, %arg1: i32) -> (i32, i32) {
    %c0_i32 = arith.constant 0 : i32
    %c0_i32_0 = arith.constant 0 : i32
    %c0_i32_1 = arith.constant 0 : i32
    return %c0_i32, %c0_i32_0 : i32, i32
  }
  func.func @transform_6(%arg0: i32, %arg1: i32) -> (i32, i32) {
    %c0_i32 = arith.constant 0 : i32
    %c0_i32_0 = arith.constant 0 : i32
    %c0_i32_1 = arith.constant 0 : i32
    return %c0_i32, %c0_i32_0 : i32, i32
  }
  func.func @transform_7(%arg0: i32, %arg1: i32) -> (i32, i32) {
    %c0_i32 = arith.constant 0 : i32
    %c0_i32_0 = arith.constant 0 : i32
    %c0_i32_1 = arith.constant 0 : i32
    return %c0_i32, %c0_i32_0 : i32, i32
  }
  func.func @transform_8(%arg0: i32, %arg1: i32) -> (i32, i32) {
    %c0_i32 = arith.constant 0 : i32
    %c0_i32_0 = arith.constant 0 : i32
    %c0_i32_1 = arith.constant 0 : i32
    return %c0_i32, %c0_i32_0 : i32, i32
  }
  func.func @transform_9(%arg0: i32, %arg1: i32) -> (i32, i32, i32) {
    %c0_i32 = arith.constant 0 : i32
    %c0_i32_0 = arith.constant 0 : i32
    return %arg0, %c0_i32, %arg1 : i32, i32, i32
  }
}

</mosaic_0001>

<llo_original>
// kernel: tpu_custom_call.1
$region0: #{tpu_custom_call.1}
  #allocation0 [shape = 'u32[]', space=smem, size = 0x4, offset = 0x4, fixed_abs, tag = 'smem constant byte address 0x4 - core index']
  #allocation1 [shape = 'u32[144,128]{1,0:T(1,128)}', space=vmem, size = 0x12000, scoped, tag = 'internal scratch']
  %s0 = inlined_call_operand.vmem [shape: f32[2,16,300], index: 0, kind: input, shape index: {}]
  %s1 = inlined_call_operand.hbm [shape: f32[2,16,300], index: 1, kind: input, shape index: {}]
  %s2 = inlined_call_operand.hbm [shape: f32[2,16,300], index: 2, kind: input, shape index: {}]
  %s3 = inlined_call_operand.vmem [shape: f32[16,1], index: 3, kind: input, shape index: {}]
  %s4 = inlined_call_operand.vmem [shape: f32[16,1], index: 4, kind: input, shape index: {}]
  %s5 = inlined_call_operand.vmem [shape: bf16[32,16], index: 5, kind: input, shape index: {}]
  %s6 = inlined_call_operand.vmem [shape: f32[32,1], index: 6, kind: input, shape index: {}]
  %s7 = inlined_call_operand.vmem [shape: f32[32,1], index: 7, kind: input, shape index: {}]
  %s8 = inlined_call_operand.vmem [shape: bf16[24,32], index: 8, kind: input, shape index: {}]
  %s9 = inlined_call_operand.hbm [shape: f32[2,24,300], index: 9, kind: output, shape index: {}]
  %s10 = sld [smem:[#allocation0]]
  $region143: #{tpu_custom_call.1} parent=0
    _
  %s12 = ssub.s32 1, %s10
  %s13 = scalar_select 0, %s12, %s10
  $region1: #{tpu_custom_call.1} parent=0
    #allocation2 [shape = 'u8[32768]{0}', space=vmem, size = 0x8000, scoped, tag = 'input window, operand 0']
    #allocation3 [shape = 'u8[16384]{0}', space=vmem, size = 0x4000, scoped, tag = 'input window, operand 1']
    #allocation4 [shape = 's32[2]{0}', space=sflag, size = 0x8, scoped, tag = 'scoped memory for tpu_custom_call.1']
    #allocation5 [shape = 's32[2]{0}', space=sflag, size = 0x8, scoped, tag = 'scoped memory for tpu_custom_call.1']
    #allocation6 [shape = 'u8[16384]{0}', space=vmem, size = 0x4000, scoped, tag = 'input window, operand 2']
    #allocation7 [shape = 's32[2]{0}', space=sflag, size = 0x8, scoped, tag = 'scoped memory for tpu_custom_call.1']
    #allocation8 [shape = 'u8[49152]{0}', space=vmem, size = 0xc000, scoped, tag = 'output window, operand 0']
    %14 = vsyncpa [#allocation4], 0
    %s15 = scalar_lea.sflag [#allocation4], 1
    %16 = vsyncpa %s15, 0
    %17 = vsyncpa [#allocation7], 0
    %s18 = scalar_lea.sflag [#allocation7], 1
    %19 = vsyncpa %s18, 0
    %20 = vsyncpa [#allocation5], 0
    %s21 = scalar_lea.sflag [#allocation5], 1
    %22 = vsyncpa %s21, 0
    loop: start=0, step=1, limit=6
    $region2: #{tpu_custom_call.1} parent=1 // loop_pre_header
      _
    $region3: #{tpu_custom_call.1} parent=1 // loop_header
      %s24 = sphi 0, %s28
      %p25 = scmp.ge.s32.totalorder %s24, 6
      %s31 = sphi 0, %s43
      %s32 = sphi 0, %s39
      %s33 = sphi 0, %s31
      %s34 = sphi 0, %s32
      %s35 = sphi 0, %s33
      %s36 = sphi 0, %s34
      %s48 = sphi 0, %s50
      %s51 = sphi 0, %s48
      %s52 = sphi 0, %s51
      %s68 = sphi 0, %s52
      %s84 = sphi 0, %s86
      %s87 = sphi 0, %s84
      %s88 = sphi 0, %s87
      %s104 = sphi 0, %s88
      %s120 = sphi 0, %s122
      %s123 = sphi 0, %s120
      %s124 = sphi 0, %s123
      %s140 = sphi 0, %s124
      %s144 = sphi 0, %s144
      %s146 = sphi 0, %s144
      %s147 = sphi 0, %s146
      %s161 = sphi 0, %s147
      %s165 = sphi 0, %s165
      %s167 = sphi 0, %s165
      %s168 = sphi 0, %s167
      %s182 = sphi 0, %s168
      %s186 = sphi 0, %s186
      %s188 = sphi 0, %s186
      %s189 = sphi 0, %s188
      %s203 = sphi 0, %s189
      %s207 = sphi 0, %s207
      %s209 = sphi 0, %s207
      %s210 = sphi 0, %s209
      %s224 = sphi 0, %s210
      %s228 = sphi 0, %s228
      %s230 = sphi 0, %s228
      %s231 = sphi 0, %s230
      %s245 = sphi 0, %s231
      %s249 = sphi 0, %s249
      %s251 = sphi 0, %s249
      %s252 = sphi 0, %s251
      %s266 = sphi 0, %s252
      %s274 = sphi 0, %s276
      %s277 = sphi 0, %s274
      %s278 = sphi 0, %s277
      %s294 = sphi 0, %s278
    $region4: #{tpu_custom_call.1} parent=1 // loop_header_branch
      %27 = sbr.rel (%p25) target = $region8
    $region5: #{tpu_custom_call.1} parent=1 // loop_body
      %s29 = ssub.s32 %s24, 1
      %s30 = ssub.s32 %s24, 2
      %s37 = sadd.s32 1, %s32
      %p38 = scmp.ge.s32.totalorder %s37, 2
      %s39 = scalar_select %p38, 0, %s37
      %s40 = sadd.s32 1, %s31
      %s41 = scalar_select %p38, %s40, %s31
      %p42 = scmp.ge.s32.totalorder %s41, 2
      %s43 = scalar_select %p42, 0, %s41
      %s44 = ssub.s32 %s31, %s43
      %s45 = ssub.s32 %s32, %s39
      %s46 = sor.u32 %s44, %s45
      %p47 = scmp.eq.s32.totalorder %s46, 0
      %s49 = sadd.s32 %s48, 1
      %s50 = scalar_select %p47, %s48, %s49
      %p53 = pneg %p47
      %p54 = scmp.eq.s32.totalorder %s24, 3
      %p55 = por %p53, %p54
      %p56 = scmp.ne.s32.totalorder %s48, %s51
      %p57 = scmp.eq.s32.totalorder %s24, 0
      %p58 = por %p56, %p57
      %p59 = scmp.ne.s32.totalorder %s48, %s51
      %p60 = scmp.eq.s32.totalorder %s29, 3
      %p61 = por %p59, %p60
      %p62 = scmp.ne.s32.totalorder %s51, %s52
      %p63 = scmp.eq.s32.totalorder %s29, 0
      %p64 = por %p62, %p63
      %p65 = scmp.ne.s32.totalorder %s51, %s52
      %p66 = scmp.eq.s32.totalorder %s30, 3
      %p67 = por %p65, %p66
      %p69 = scmp.ne.s32.totalorder %s52, %s68
      %p70 = scmp.eq.s32.totalorder %s30, 0
      %p71 = por %p69, %p70
      %s72 = smul.u32 %s32, 2
      %s73 = ssub.s32 %s72, 1
      %p74 = scmp.gt.s32.totalorder %s73, 0
      %s75 = scalar_select %p74, %s73, 0
      %s76 = smul.u32 %s39, 2
      %s77 = ssub.s32 %s76, 1
      %p78 = scmp.gt.s32.totalorder %s77, 0
      %s79 = scalar_select %p78, %s77, 0
      %s80 = ssub.s32 %s31, %s43
      %s81 = ssub.s32 %s75, %s79
      %s82 = sor.u32 %s80, %s81
      %p83 = scmp.eq.s32.totalorder %s82, 0
      %s85 = sadd.s32 %s84, 1
      %s86 = scalar_select %p83, %s84, %s85
      %p89 = pneg %p83
      %p90 = scmp.eq.s32.totalorder %s24, 3
      %p91 = por %p89, %p90
      %p92 = scmp.ne.s32.totalorder %s84, %s87
      %p93 = scmp.eq.s32.totalorder %s24, 0
      %p94 = por %p92, %p93
      %p95 = scmp.ne.s32.totalorder %s84, %s87
      %p96 = scmp.eq.s32.totalorder %s29, 3
      %p97 = por %p95, %p96
      %p98 = scmp.ne.s32.totalorder %s87, %s88
      %p99 = scmp.eq.s32.totalorder %s29, 0
      %p100 = por %p98, %p99
      %p101 = scmp.ne.s32.totalorder %s87, %s88
      %p102 = scmp.eq.s32.totalorder %s30, 3
      %p103 = por %p101, %p102
      %p105 = scmp.ne.s32.totalorder %s88, %s104
      %p106 = scmp.eq.s32.totalorder %s30, 0
      %p107 = por %p105, %p106
      %s108 = sadd.s32 %s32, 1
      %s109 = smul.u32 %s108, 2
      %p110 = scmp.lt.s32.totalorder %s109, 2
      %s111 = scalar_select %p110, %s109, 2
      %s112 = sadd.s32 %s39, 1
      %s113 = smul.u32 %s112, 2
      %p114 = scmp.lt.s32.totalorder %s113, 2
      %s115 = scalar_select %p114, %s113, 2
      %s116 = ssub.s32 %s31, %s43
      %s117 = ssub.s32 %s111, %s115
      %s118 = sor.u32 %s116, %s117
      %p119 = scmp.eq.s32.totalorder %s118, 0
      %s121 = sadd.s32 %s120, 1
      %s122 = scalar_select %p119, %s120, %s121
      %p125 = pneg %p119
      %p126 = scmp.eq.s32.totalorder %s24, 3
      %p127 = por %p125, %p126
      %p128 = scmp.ne.s32.totalorder %s120, %s123
      %p129 = scmp.eq.s32.totalorder %s24, 0
      %p130 = por %p128, %p129
      %p131 = scmp.ne.s32.totalorder %s120, %s123
      %p132 = scmp.eq.s32.totalorder %s29, 3
      %p133 = por %p131, %p132
      %p134 = scmp.ne.s32.totalorder %s123, %s124
      %p135 = scmp.eq.s32.totalorder %s29, 0
      %p136 = por %p134, %p135
      %p137 = scmp.ne.s32.totalorder %s123, %s124
      %p138 = scmp.eq.s32.totalorder %s30, 3
      %p139 = por %p137, %p138
      %p141 = scmp.ne.s32.totalorder %s124, %s140
      %p142 = scmp.eq.s32.totalorder %s30, 0
      %p143 = por %p141, %p142
      %s145 = sadd.s32 %s144, 1
      %p148 = scmp.eq.s32.totalorder %s24, 3
      %p149 = scmp.ne.s32.totalorder %s144, %s146
      %p150 = scmp.eq.s32.totalorder %s24, 0
      %p151 = por %p149, %p150
      %p152 = scmp.ne.s32.totalorder %s144, %s146
      %p153 = scmp.eq.s32.totalorder %s29, 3
      %p154 = por %p152, %p153
      %p155 = scmp.ne.s32.totalorder %s146, %s147
      %p156 = scmp.eq.s32.totalorder %s29, 0
      %p157 = por %p155, %p156
      %p158 = scmp.ne.s32.totalorder %s146, %s147
      %p159 = scmp.eq.s32.totalorder %s30, 3
      %p160 = por %p158, %p159
      %p162 = scmp.ne.s32.totalorder %s147, %s161
      %p163 = scmp.eq.s32.totalorder %s30, 0
      %p164 = por %p162, %p163
      %s166 = sadd.s32 %s165, 1
      %p169 = scmp.eq.s32.totalorder %s24, 3
      %p170 = scmp.ne.s32.totalorder %s165, %s167
      %p171 = scmp.eq.s32.totalorder %s24, 0
      %p172 = por %p170, %p171
      %p173 = scmp.ne.s32.totalorder %s165, %s167
      %p174 = scmp.eq.s32.totalorder %s29, 3
      %p175 = por %p173, %p174
      %p176 = scmp.ne.s32.totalorder %s167, %s168
      %p177 = scmp.eq.s32.totalorder %s29, 0
      %p178 = por %p176, %p177
      %p179 = scmp.ne.s32.totalorder %s167, %s168
      %p180 = scmp.eq.s32.totalorder %s30, 3
      %p181 = por %p179, %p180
      %p183 = scmp.ne.s32.totalorder %s168, %s182
      %p184 = scmp.eq.s32.totalorder %s30, 0
      %p185 = por %p183, %p184
      %s187 = sadd.s32 %s186, 1
      %p190 = scmp.eq.s32.totalorder %s24, 3
      %p191 = scmp.ne.s32.totalorder %s186, %s188
      %p192 = scmp.eq.s32.totalorder %s24, 0
      %p193 = por %p191, %p192
      %p194 = scmp.ne.s32.totalorder %s186, %s188
      %p195 = scmp.eq.s32.totalorder %s29, 3
      %p196 = por %p194, %p195
      %p197 = scmp.ne.s32.totalorder %s188, %s189
      %p198 = scmp.eq.s32.totalorder %s29, 0
      %p199 = por %p197, %p198
      %p200 = scmp.ne.s32.totalorder %s188, %s189
      %p201 = scmp.eq.s32.totalorder %s30, 3
      %p202 = por %p200, %p201
      %p204 = scmp.ne.s32.totalorder %s189, %s203
      %p205 = scmp.eq.s32.totalorder %s30, 0
      %p206 = por %p204, %p205
      %s208 = sadd.s32 %s207, 1
      %p211 = scmp.eq.s32.totalorder %s24, 3
      %p212 = scmp.ne.s32.totalorder %s207, %s209
      %p213 = scmp.eq.s32.totalorder %s24, 0
      %p214 = por %p212, %p213
      %p215 = scmp.ne.s32.totalorder %s207, %s209
      %p216 = scmp.eq.s32.totalorder %s29, 3
      %p217 = por %p215, %p216
      %p218 = scmp.ne.s32.totalorder %s209, %s210
      %p219 = scmp.eq.s32.totalorder %s29, 0
      %p220 = por %p218, %p219
      %p221 = scmp.ne.s32.totalorder %s209, %s210
      %p222 = scmp.eq.s32.totalorder %s30, 3
      %p223 = por %p221, %p222
      %p225 = scmp.ne.s32.totalorder %s210, %s224
      %p226 = scmp.eq.s32.totalorder %s30, 0
      %p227 = por %p225, %p226
      %s229 = sadd.s32 %s228, 1
      %p232 = scmp.eq.s32.totalorder %s24, 3
      %p233 = scmp.ne.s32.totalorder %s228, %s230
      %p234 = scmp.eq.s32.totalorder %s24, 0
      %p235 = por %p233, %p234
      %p236 = scmp.ne.s32.totalorder %s228, %s230
      %p237 = scmp.eq.s32.totalorder %s29, 3
      %p238 = por %p236, %p237
      %p239 = scmp.ne.s32.totalorder %s230, %s231
      %p240 = scmp.eq.s32.totalorder %s29, 0
      %p241 = por %p239, %p240
      %p242 = scmp.ne.s32.totalorder %s230, %s231
      %p243 = scmp.eq.s32.totalorder %s30, 3
      %p244 = por %p242, %p243
      %p246 = scmp.ne.s32.totalorder %s231, %s245
      %p247 = scmp.eq.s32.totalorder %s30, 0
      %p248 = por %p246, %p247
      %s250 = sadd.s32 %s249, 1
      %p253 = scmp.eq.s32.totalorder %s24, 3
      %p254 = scmp.ne.s32.totalorder %s249, %s251
      %p255 = scmp.eq.s32.totalorder %s24, 0
      %p256 = por %p254, %p255
      %p257 = scmp.ne.s32.totalorder %s249, %s251
      %p258 = scmp.eq.s32.totalorder %s29, 3
      %p259 = por %p257, %p258
      %p260 = scmp.ne.s32.totalorder %s251, %s252
      %p261 = scmp.eq.s32.totalorder %s29, 0
      %p262 = por %p260, %p261
      %p263 = scmp.ne.s32.totalorder %s251, %s252
      %p264 = scmp.eq.s32.totalorder %s30, 3
      %p265 = por %p263, %p264
      %p267 = scmp.ne.s32.totalorder %s252, %s266
      %p268 = scmp.eq.s32.totalorder %s30, 0
      %p269 = por %p267, %p268
      %s270 = ssub.s32 %s31, %s43
      %s271 = ssub.s32 %s32, %s39
      %s272 = sor.u32 %s270, %s271
      %p273 = scmp.eq.s32.totalorder %s272, 0
      %s275 = sadd.s32 %s274, 1
      %s276 = scalar_select %p273, %s274, %s275
      %p279 = pneg %p273
      %p280 = scmp.eq.s32.totalorder %s24, 3
      %p281 = por %p279, %p280
      %p282 = scmp.ne.s32.totalorder %s274, %s277
      %p283 = scmp.eq.s32.totalorder %s24, 0
      %p284 = por %p282, %p283
      %p285 = scmp.ne.s32.totalorder %s274, %s277
      %p286 = scmp.eq.s32.totalorder %s29, 3
      %p287 = por %p285, %p286
      %p288 = scmp.ne.s32.totalorder %s277, %s278
      %p289 = scmp.eq.s32.totalorder %s29, 0
      %p290 = por %p288, %p289
      %p291 = scmp.ne.s32.totalorder %s277, %s278
      %p292 = scmp.eq.s32.totalorder %s30, 3
      %p293 = por %p291, %p292
      %p295 = scmp.ne.s32.totalorder %s278, %s294
      %p296 = scmp.eq.s32.totalorder %s30, 0
      %p297 = por %p295, %p296
      %p298 = scmp.le.s32.totalorder 1, %s24
      %p299 = scmp.lt.s32.totalorder %s24, 5
      %p300 = pnand %p298, %p299
      %p301 = pneg %p300
      // Predicated region
      $region9: #{tpu_custom_call.1} parent=5 // pred_check
        _
      $region10: #{tpu_custom_call.1} parent=5 // pred_check_branch
        %303 = sbr.rel (%p300) target = $region12
      $region11: #{tpu_custom_call.1} parent=5 // pred_region
        %s304 = ssub.s32 %s24, 1
        // Predicated region
        $region13: #{tpu_custom_call.1} parent=11 // pred_check
          %p305 = pneg %p157
        $region14: #{tpu_custom_call.1} parent=11 // pred_check_branch
          %307 = sbr.rel (%p305) target = $region16
        $region15: #{tpu_custom_call.1} parent=11 // pred_region
          _
        $region16: #{tpu_custom_call.1} parent=11 // pred_fallthru
          _
        // Predicated region
        $region17: #{tpu_custom_call.1} parent=11 // pred_check
          %p308 = pneg %p178
        $region18: #{tpu_custom_call.1} parent=11 // pred_check_branch
          %310 = sbr.rel (%p308) target = $region20
        $region19: #{tpu_custom_call.1} parent=11 // pred_region
          _
        $region20: #{tpu_custom_call.1} parent=11 // pred_fallthru
          _
        // Predicated region
        $region21: #{tpu_custom_call.1} parent=11 // pred_check
          %p311 = pneg %p199
        $region22: #{tpu_custom_call.1} parent=11 // pred_check_branch
          %313 = sbr.rel (%p311) target = $region24
        $region23: #{tpu_custom_call.1} parent=11 // pred_region
          _
        $region24: #{tpu_custom_call.1} parent=11 // pred_fallthru
          _
        // Predicated region
        $region25: #{tpu_custom_call.1} parent=11 // pred_check
          %p314 = pneg %p220
        $region26: #{tpu_custom_call.1} parent=11 // pred_check_branch
          %316 = sbr.rel (%p314) target = $region28
        $region27: #{tpu_custom_call.1} parent=11 // pred_region
          _
        $region28: #{tpu_custom_call.1} parent=11 // pred_fallthru
          _
        // Predicated region
        $region29: #{tpu_custom_call.1} parent=11 // pred_check
          %p317 = pneg %p241
        $region30: #{tpu_custom_call.1} parent=11 // pred_check_branch
          %319 = sbr.rel (%p317) target = $region32
        $region31: #{tpu_custom_call.1} parent=11 // pred_region
          _
        $region32: #{tpu_custom_call.1} parent=11 // pred_fallthru
          _
        // Predicated region
        $region33: #{tpu_custom_call.1} parent=11 // pred_check
          %p320 = pneg %p262
        $region34: #{tpu_custom_call.1} parent=11 // pred_check_branch
          %322 = sbr.rel (%p320) target = $region36
        $region35: #{tpu_custom_call.1} parent=11 // pred_region
          _
        $region36: #{tpu_custom_call.1} parent=11 // pred_fallthru
          _
      $region12: #{tpu_custom_call.1} parent=5 // pred_fallthru
        _
      %p323 = scmp.lt.s32.totalorder %s24, 4
      // Predicated region
      $region37: #{tpu_custom_call.1} parent=5 // pred_check
        %p324 = pneg %p323
      $region38: #{tpu_custom_call.1} parent=5 // pred_check_branch
        %326 = sbr.rel (%p324) target = $region40
      $region39: #{tpu_custom_call.1} parent=5 // pred_region
        // Predicated region
        $region41: #{tpu_custom_call.1} parent=39 // pred_check
          %p327 = pneg %p58
        $region42: #{tpu_custom_call.1} parent=39 // pred_check_branch
          %329 = sbr.rel (%p327) target = $region44
        $region43: #{tpu_custom_call.1} parent=39 // pred_region
          %s330 = sand.u32 %s48, 1
          %s331 = sand.u32 %s48, 1
          %s332 = smul.addr %s331, 32
          %s333 = scalar_lea.vmem [#allocation2], %s332
          %s334 = smul.u32 2, %s32
          %s335 = ssub.s32 3, %s334
          %p336 = scmp.lt.s32.totalorder %s335, 2
          %s337 = scalar_select %p336, %s335, 2
          %s338 = smul.u32 256, %s337
          %p339 = scmp.ne.s32.totalorder 0, %s338
          %s340 = smul.addr %s31, 6
          %s341 = sadd.s32 %s334, %s340
          %s342 = smul.addr %s341, 8
          %s343 = scalar_lea.vmem %s0, %s342
          %s344 = smul.u32 %s337, 8
          // Predicated region
          $region45: #{tpu_custom_call.1} parent=43 // pred_check
            %p345 = pneg %p339
          $region46: #{tpu_custom_call.1} parent=43 // pred_check_branch
            %347 = sbr.rel (%p345) target = $region48
          $region47: #{tpu_custom_call.1} parent=43 // pred_region
            %p348 = scmp.lt.u32.totalorder %s344, 8
            %p349 = pneg %p348
            // Predicated region
            $region49: #{tpu_custom_call.1} parent=47 // pred_check
              _
            $region50: #{tpu_custom_call.1} parent=47 // pred_check_branch
              %351 = sbr.rel (%p348) target = $region52
            $region51: #{tpu_custom_call.1} parent=47 // pred_region
              %s368 = sand.u32 %s344, 7
              %p369 = scmp.eq.s32.totalorder %s368, 0
              // Predicated region
              $region64: #{tpu_custom_call.1} parent=51 // pred_check
                %p370 = pneg %p369
              $region65: #{tpu_custom_call.1} parent=51 // pred_check_branch
                %372 = sbr.rel (%p370) target = $region67
              $region66: #{tpu_custom_call.1} parent=51 // pred_region
                %s373 = sshrl.u32 %s344, 3
                %s374 = sshrl.u32 %s373, 5
                // While loop
                $region68: #{tpu_custom_call.1} parent=66 // loop_pre_header
                  _
                $region69: #{tpu_custom_call.1} parent=66 // loop_header
                  %s378 = sphi 0, %s380
                  %p379 = scmp.ge.s32.totalorder %s378, %s374
                  %s383 = sphi 0, %s516
                  %s384 = sphi %s343, %s519
                  %s385 = sphi %s333, %s520
                $region70: #{tpu_custom_call.1} parent=66 // loop_header_branch
                  %382 = sbr.rel (%p379) target = $region74
                $region71: #{tpu_custom_call.1} parent=66 // loop_body
                  %v386 = vld [vmem:[%s384] sm:$0xff]
                  %387 = vst [vmem:[%s385] sm:$0xff] %v386
                  %v388 = vld [vmem:[%s384 + $0x8] sm:$0xff]
                  %389 = vst [vmem:[%s385 + $0x8] sm:$0xff] %v388
                  %v390 = vld [vmem:[%s384 + $0x10] sm:$0xff]
                  %391 = vst [vmem:[%s385 + $0x10] sm:$0xff] %v390
                  %v392 = vld [vmem:[%s384 + $0x18] sm:$0xff]
                  %393 = vst [vmem:[%s385 + $0x18] sm:$0xff] %v392
                  %v394 = vld [vmem:[%s384 + $0x20] sm:$0xff]
                  %395 = vst [vmem:[%s385 + $0x20] sm:$0xff] %v394
                  %v396 = vld [vmem:[%s384 + $0x28] sm:$0xff]
                  %397 = vst [vmem:[%s385 + $0x28] sm:$0xff] %v396
                  %v398 = vld [vmem:[%s384 + $0x30] sm:$0xff]
                  %399 = vst [vmem:[%s385 + $0x30] sm:$0xff] %v398
                  %v400 = vld [vmem:[%s384 + $0x38] sm:$0xff]
                  %401 = vst [vmem:[%s385 + $0x38] sm:$0xff] %v400
                  %v402 = vld [vmem:[%s384 + $0x40] sm:$0xff]
                  %403 = vst [vmem:[%s385 + $0x40] sm:$0xff] %v402
                  %v404 = vld [vmem:[%s384 + $0x48] sm:$0xff]
                  %405 = vst [vmem:[%s385 + $0x48] sm:$0xff] %v404
                  %v406 = vld [vmem:[%s384 + $0x50] sm:$0xff]
                  %407 = vst [vmem:[%s385 + $0x50] sm:$0xff] %v406
                  %v408 = vld [vmem:[%s384 + $0x58] sm:$0xff]
                  %409 = vst [vmem:[%s385 + $0x58] sm:$0xff] %v408
                  %v410 = vld [vmem:[%s384 + $0x60] sm:$0xff]
                  %411 = vst [vmem:[%s385 + $0x60] sm:$0xff] %v410
                  %v412 = vld [vmem:[%s384 + $0x68] sm:$0xff]
                  %413 = vst [vmem:[%s385 + $0x68] sm:$0xff] %v412
                  %v414 = vld [vmem:[%s384 + $0x70] sm:$0xff]
                  %415 = vst [vmem:[%s385 + $0x70] sm:$0xff] %v414
                  %v416 = vld [vmem:[%s384 + $0x78] sm:$0xff]
                  %417 = vst [vmem:[%s385 + $0x78] sm:$0xff] %v416
                  %v418 = vld [vmem:[%s384 + $0x80] sm:$0xff]
                  %419 = vst [vmem:[%s385 + $0x80] sm:$0xff] %v418
                  %v420 = vld [vmem:[%s384 + $0x88] sm:$0xff]
                  %421 = vst [vmem:[%s385 + $0x88] sm:$0xff] %v420
                  %v422 = vld [vmem:[%s384 + $0x90] sm:$0xff]
                  %423 = vst [vmem:[%s385 + $0x90] sm:$0xff] %v422
                  %v424 = vld [vmem:[%s384 + $0x98] sm:$0xff]
                  %425 = vst [vmem:[%s385 + $0x98] sm:$0xff] %v424
                  %v426 = vld [vmem:[%s384 + $0xa0] sm:$0xff]
                  %427 = vst [vmem:[%s385 + $0xa0] sm:$0xff] %v426
                  %v428 = vld [vmem:[%s384 + $0xa8] sm:$0xff]
                  %429 = vst [vmem:[%s385 + $0xa8] sm:$0xff] %v428
                  %v430 = vld [vmem:[%s384 + $0xb0] sm:$0xff]
                  %431 = vst [vmem:[%s385 + $0xb0] sm:$0xff] %v430
                  %v432 = vld [vmem:[%s384 + $0xb8] sm:$0xff]
                  %433 = vst [vmem:[%s385 + $0xb8] sm:$0xff] %v432
                  %v434 = vld [vmem:[%s384 + $0xc0] sm:$0xff]
                  %435 = vst [vmem:[%s385 + $0xc0] sm:$0xff] %v434
                  %v436 = vld [vmem:[%s384 + $0xc8] sm:$0xff]
                  %437 = vst [vmem:[%s385 + $0xc8] sm:$0xff] %v436
                  %v438 = vld [vmem:[%s384 + $0xd0] sm:$0xff]
                  %439 = vst [vmem:[%s385 + $0xd0] sm:$0xff] %v438
                  %v440 = vld [vmem:[%s384 + $0xd8] sm:$0xff]
                  %441 = vst [vmem:[%s385 + $0xd8] sm:$0xff] %v440
                  %v442 = vld [vmem:[%s384 + $0xe0] sm:$0xff]
                  %443 = vst [vmem:[%s385 + $0xe0] sm:$0xff] %v442
                  %v444 = vld [vmem:[%s384 + $0xe8] sm:$0xff]
                  %445 = vst [vmem:[%s385 + $0xe8] sm:$0xff] %v444
                  %v446 = vld [vmem:[%s384 + $0xf0] sm:$0xff]
                  %447 = vst [vmem:[%s385 + $0xf0] sm:$0xff] %v446
                  %v448 = vld [vmem:[%s384 + $0xf8] sm:$0xff]
                  %449 = vst [vmem:[%s385 + $0xf8] sm:$0xff] %v448
                  %v450 = vld [vmem:[%s384 + $0x18] sm:$0xff]
                  %451 = vst [vmem:[%s385 + $0x10] sm:$0xff] %v450
                  %v452 = vld [vmem:[%s384 + $0x20] sm:$0xff]
                  %453 = vst [vmem:[%s385 + $0x18] sm:$0xff] %v452
                  %v454 = vld [vmem:[%s384 + $0x28] sm:$0xff]
                  %455 = vst [vmem:[%s385 + $0x20] sm:$0xff] %v454
                  %v456 = vld [vmem:[%s384 + $0x30] sm:$0xff]
                  %457 = vst [vmem:[%s385 + $0x28] sm:$0xff] %v456
                  %v458 = vld [vmem:[%s384 + $0x38] sm:$0xff]
                  %459 = vst [vmem:[%s385 + $0x30] sm:$0xff] %v458
                  %v460 = vld [vmem:[%s384 + $0x40] sm:$0xff]
                  %461 = vst [vmem:[%s385 + $0x38] sm:$0xff] %v460
                  %v462 = vld [vmem:[%s384 + $0x48] sm:$0xff]
                  %463 = vst [vmem:[%s385 + $0x40] sm:$0xff] %v462
                  %v464 = vld [vmem:[%s384 + $0x50] sm:$0xff]
                  %465 = vst [vmem:[%s385 + $0x48] sm:$0xff] %v464
                  %v466 = vld [vmem:[%s384 + $0x58] sm:$0xff]
                  %467 = vst [vmem:[%s385 + $0x50] sm:$0xff] %v466
                  %v468 = vld [vmem:[%s384 + $0x60] sm:$0xff]
                  %469 = vst [vmem:[%s385 + $0x58] sm:$0xff] %v468
                  %v470 = vld [vmem:[%s384 + $0x68] sm:$0xff]
                  %471 = vst [vmem:[%s385 + $0x60] sm:$0xff] %v470
                  %v472 = vld [vmem:[%s384 + $0x70] sm:$0xff]
                  %473 = vst [vmem:[%s385 + $0x68] sm:$0xff] %v472
                  %v474 = vld [vmem:[%s384 + $0x78] sm:$0xff]
                  %475 = vst [vmem:[%s385 + $0x70] sm:$0xff] %v474
                  %v476 = vld [vmem:[%s384 + $0x80] sm:$0xff]
                  %477 = vst [vmem:[%s385 + $0x78] sm:$0xff] %v476
                  %v478 = vld [vmem:[%s384 + $0x88] sm:$0xff]
                  %479 = vst [vmem:[%s385 + $0x80] sm:$0xff] %v478
                  %v480 = vld [vmem:[%s384 + $0x90] sm:$0xff]
                  %481 = vst [vmem:[%s385 + $0x88] sm:$0xff] %v480
                  %v482 = vld [vmem:[%s384 + $0x98] sm:$0xff]
                  %483 = vst [vmem:[%s385 + $0x90] sm:$0xff] %v482
                  %v484 = vld [vmem:[%s384 + $0xa0] sm:$0xff]
                  %485 = vst [vmem:[%s385 + $0x98] sm:$0xff] %v484
                  %v486 = vld [vmem:[%s384 + $0xa8] sm:$0xff]
                  %487 = vst [vmem:[%s385 + $0xa0] sm:$0xff] %v486
                  %v488 = vld [vmem:[%s384 + $0xb0] sm:$0xff]
                  %489 = vst [vmem:[%s385 + $0xa8] sm:$0xff] %v488
                  %v490 = vld [vmem:[%s384 + $0xb8] sm:$0xff]
                  %491 = vst [vmem:[%s385 + $0xb0] sm:$0xff] %v490
                  %v492 = vld [vmem:[%s384 + $0xc0] sm:$0xff]
                  %493 = vst [vmem:[%s385 + $0xb8] sm:$0xff] %v492
                  %v494 = vld [vmem:[%s384 + $0xc8] sm:$0xff]
                  %495 = vst [vmem:[%s385 + $0xc0] sm:$0xff] %v494
                  %v496 = vld [vmem:[%s384 + $0xd0] sm:$0xff]
                  %497 = vst [vmem:[%s385 + $0xc8] sm:$0xff] %v496
                  %v498 = vld [vmem:[%s384 + $0xd8] sm:$0xff]
                  %499 = vst [vmem:[%s385 + $0xd0] sm:$0xff] %v498
                  %v500 = vld [vmem:[%s384 + $0xe0] sm:$0xff]
                  %501 = vst [vmem:[%s385 + $0xd8] sm:$0xff] %v500
                  %v502 = vld [vmem:[%s384 + $0xe8] sm:$0xff]
                  %503 = vst [vmem:[%s385 + $0xe0] sm:$0xff] %v502
                  %v504 = vld [vmem:[%s384 + $0xf0] sm:$0xff]
                  %505 = vst [vmem:[%s385 + $0xe8] sm:$0xff] %v504
                  %v506 = vld [vmem:[%s384 + $0xf8] sm:$0xff]
                  %507 = vst [vmem:[%s385 + $0xf0] sm:$0xff] %v506
                  %v508 = vld [vmem:[%s384 + $0x100] sm:$0xff]
                  %509 = vst [vmem:[%s385 + $0xf8] sm:$0xff] %v508
                  %v510 = vld [vmem:[%s384 + $0x108] sm:$0xff]
                  %511 = vst [vmem:[%s385 + $0x100] sm:$0xff] %v510
                  %v512 = vld [vmem:[%s384 + $0x110] sm:$0xff]
                  %513 = vst [vmem:[%s385 + $0x108] sm:$0xff] %v512
                  %s514 = sadd.s32 1, %s383
                  %p515 = scmp.ge.s32.totalorder %s514, %s374
                  %s516 = scalar_select %p515, 0, %s514
                  %s517 = smul.u32 %s516, 256
                  %s518 = smul.u32 %s516, 256
                  %s519 = scalar_lea.vmem %s343, %s517
                  %s520 = scalar_lea.vmem %s333, %s518 [#allocation2]
                $region72: #{tpu_custom_call.1} parent=66 // loop_footer
                  %s380 = sadd.s32 %s378, 1
                $region73: #{tpu_custom_call.1} parent=66 // loop_footer_branch
                  %377 = sbr.rel target = $region69
                $region74: #{tpu_custom_call.1} parent=66 // loop_exit
                  _
                %s521 = sshrl.u32 %s373, 5
                %s522 = sand.u32 %s373, 31
                %s523 = smul.u32 %s521, 32
                %s524 = smul.u32 128, %s523
                %s525 = sshra.s32 %s524, 4
                %s526 = scalar_lea.vmem %s343, %s525
                %s527 = smul.u32 128, %s523
                %s528 = sshra.s32 %s527, 4
                %s529 = scalar_lea.vmem %s333, %s528 [#allocation2]
                // While loop
                $region75: #{tpu_custom_call.1} parent=66 // loop_pre_header
                  _
                $region76: #{tpu_custom_call.1} parent=66 // loop_header
                  %s533 = sphi 0, %s535
                  %p534 = scmp.ge.s32.totalorder %s533, %s522
                  %s538 = sphi 0, %s547
                  %s539 = sphi %s526, %s550
                  %s540 = sphi %s529, %s551
                $region77: #{tpu_custom_call.1} parent=66 // loop_header_branch
                  %537 = sbr.rel (%p534) target = $region81
                $region78: #{tpu_custom_call.1} parent=66 // loop_body
                  %v541 = vld [vmem:[%s539] sm:$0xff]
                  %542 = vst [vmem:[%s540] sm:$0xff] %v541
                  %v543 = vld [vmem:[%s539 + $0x18] sm:$0xff]
                  %544 = vst [vmem:[%s540 + $0x10] sm:$0xff] %v543
                  %s545 = sadd.s32 1, %s538
                  %p546 = scmp.ge.s32.totalorder %s545, %s522
                  %s547 = scalar_select %p546, 0, %s545
                  %s548 = smul.u32 %s547, 8
                  %s549 = smul.u32 %s547, 8
                  %s550 = scalar_lea.vmem %s526, %s548
                  %s551 = scalar_lea.vmem %s529, %s549 [#allocation2]
                $region79: #{tpu_custom_call.1} parent=66 // loop_footer
                  %s535 = sadd.s32 %s533, 1
                $region80: #{tpu_custom_call.1} parent=66 // loop_footer_branch
                  %532 = sbr.rel target = $region76
                $region81: #{tpu_custom_call.1} parent=66 // loop_exit
                  _
              $region67: #{tpu_custom_call.1} parent=51 // pred_fallthru
                _
              %p552 = pneg %p369
              // Predicated region
              $region82: #{tpu_custom_call.1} parent=51 // pred_check
                _
              $region83: #{tpu_custom_call.1} parent=51 // pred_check_branch
                %554 = sbr.rel (%p369) target = $region85
              $region84: #{tpu_custom_call.1} parent=51 // pred_region
                %s555 = sand.u32 %s344, 7
                %s556 = ssub.s32 %s344, %s555
                %s557 = scalar_lea.vmem %s343, %s556
                %s558 = ssub.s32 %s344, %s555
                %s559 = scalar_lea.vmem %s333, %s558 [#allocation2]
                %s560 = sshrl.u32 %s344, 3
                %s561 = sshrl.u32 %s560, 5
                // While loop
                $region86: #{tpu_custom_call.1} parent=84 // loop_pre_header
                  _
                $region87: #{tpu_custom_call.1} parent=84 // loop_header
                  %s565 = sphi 0, %s567
                  %p566 = scmp.ge.s32.totalorder %s565, %s561
                  %s570 = sphi 0, %s703
                  %s571 = sphi %s343, %s706
                  %s572 = sphi %s333, %s707
                $region88: #{tpu_custom_call.1} parent=84 // loop_header_branch
                  %569 = sbr.rel (%p566) target = $region92
                $region89: #{tpu_custom_call.1} parent=84 // loop_body
                  %v573 = vld [vmem:[%s571] sm:$0xff]
                  %574 = vst [vmem:[%s572] sm:$0xff] %v573
                  %v575 = vld [vmem:[%s571 + $0x8] sm:$0xff]
                  %576 = vst [vmem:[%s572 + $0x8] sm:$0xff] %v575
                  %v577 = vld [vmem:[%s571 + $0x10] sm:$0xff]
                  %578 = vst [vmem:[%s572 + $0x10] sm:$0xff] %v577
                  %v579 = vld [vmem:[%s571 + $0x18] sm:$0xff]
                  %580 = vst [vmem:[%s572 + $0x18] sm:$0xff] %v579
                  %v581 = vld [vmem:[%s571 + $0x20] sm:$0xff]
                  %582 = vst [vmem:[%s572 + $0x20] sm:$0xff] %v581
                  %v583 = vld [vmem:[%s571 + $0x28] sm:$0xff]
                  %584 = vst [vmem:[%s572 + $0x28] sm:$0xff] %v583
                  %v585 = vld [vmem:[%s571 + $0x30] sm:$0xff]
                  %586 = vst [vmem:[%s572 + $0x30] sm:$0xff] %v585
                  %v587 = vld [vmem:[%s571 + $0x38] sm:$0xff]
                  %588 = vst [vmem:[%s572 + $0x38] sm:$0xff] %v587
                  %v589 = vld [vmem:[%s571 + $0x40] sm:$0xff]
                  %590 = vst [vmem:[%s572 + $0x40] sm:$0xff] %v589
                  %v591 = vld [vmem:[%s571 + $0x48] sm:$0xff]
                  %592 = vst [vmem:[%s572 + $0x48] sm:$0xff] %v591
                  %v593 = vld [vmem:[%s571 + $0x50] sm:$0xff]
                  %594 = vst [vmem:[%s572 + $0x50] sm:$0xff] %v593
                  %v595 = vld [vmem:[%s571 + $0x58] sm:$0xff]
                  %596 = vst [vmem:[%s572 + $0x58] sm:$0xff] %v595
                  %v597 = vld [vmem:[%s571 + $0x60] sm:$0xff]
                  %598 = vst [vmem:[%s572 + $0x60] sm:$0xff] %v597
                  %v599 = vld [vmem:[%s571 + $0x68] sm:$0xff]
                  %600 = vst [vmem:[%s572 + $0x68] sm:$0xff] %v599
                  %v601 = vld [vmem:[%s571 + $0x70] sm:$0xff]
                  %602 = vst [vmem:[%s572 + $0x70] sm:$0xff] %v601
                  %v603 = vld [vmem:[%s571 + $0x78] sm:$0xff]
                  %604 = vst [vmem:[%s572 + $0x78] sm:$0xff] %v603
                  %v605 = vld [vmem:[%s571 + $0x80] sm:$0xff]
                  %606 = vst [vmem:[%s572 + $0x80] sm:$0xff] %v605
                  %v607 = vld [vmem:[%s571 + $0x88] sm:$0xff]
                  %608 = vst [vmem:[%s572 + $0x88] sm:$0xff] %v607
                  %v609 = vld [vmem:[%s571 + $0x90] sm:$0xff]
                  %610 = vst [vmem:[%s572 + $0x90] sm:$0xff] %v609
                  %v611 = vld [vmem:[%s571 + $0x98] sm:$0xff]
                  %612 = vst [vmem:[%s572 + $0x98] sm:$0xff] %v611
                  %v613 = vld [vmem:[%s571 + $0xa0] sm:$0xff]
                  %614 = vst [vmem:[%s572 + $0xa0] sm:$0xff] %v613
                  %v615 = vld [vmem:[%s571 + $0xa8] sm:$0xff]
                  %616 = vst [vmem:[%s572 + $0xa8] sm:$0xff] %v615
                  %v617 = vld [vmem:[%s571 + $0xb0] sm:$0xff]
                  %618 = vst [vmem:[%s572 + $0xb0] sm:$0xff] %v617
                  %v619 = vld [vmem:[%s571 + $0xb8] sm:$0xff]
                  %620 = vst [vmem:[%s572 + $0xb8] sm:$0xff] %v619
                  %v621 = vld [vmem:[%s571 + $0xc0] sm:$0xff]
                  %622 = vst [vmem:[%s572 + $0xc0] sm:$0xff] %v621
                  %v623 = vld [vmem:[%s571 + $0xc8] sm:$0xff]
                  %624 = vst [vmem:[%s572 + $0xc8] sm:$0xff] %v623
                  %v625 = vld [vmem:[%s571 + $0xd0] sm:$0xff]
                  %626 = vst [vmem:[%s572 + $0xd0] sm:$0xff] %v625
                  %v627 = vld [vmem:[%s571 + $0xd8] sm:$0xff]
                  %628 = vst [vmem:[%s572 + $0xd8] sm:$0xff] %v627
                  %v629 = vld [vmem:[%s571 + $0xe0] sm:$0xff]
                  %630 = vst [vmem:[%s572 + $0xe0] sm:$0xff] %v629
                  %v631 = vld [vmem:[%s571 + $0xe8] sm:$0xff]
                  %632 = vst [vmem:[%s572 + $0xe8] sm:$0xff] %v631
                  %v633 = vld [vmem:[%s571 + $0xf0] sm:$0xff]
                  %634 = vst [vmem:[%s572 + $0xf0] sm:$0xff] %v633
                  %v635 = vld [vmem:[%s571 + $0xf8] sm:$0xff]
                  %636 = vst [vmem:[%s572 + $0xf8] sm:$0xff] %v635
                  %v637 = vld [vmem:[%s571 + $0x18] sm:$0xff]
                  %638 = vst [vmem:[%s572 + $0x10] sm:$0xff] %v637
                  %v639 = vld [vmem:[%s571 + $0x20] sm:$0xff]
                  %640 = vst [vmem:[%s572 + $0x18] sm:$0xff] %v639
                  %v641 = vld [vmem:[%s571 + $0x28] sm:$0xff]
                  %642 = vst [vmem:[%s572 + $0x20] sm:$0xff] %v641
                  %v643 = vld [vmem:[%s571 + $0x30] sm:$0xff]
                  %644 = vst [vmem:[%s572 + $0x28] sm:$0xff] %v643
                  %v645 = vld [vmem:[%s571 + $0x38] sm:$0xff]
                  %646 = vst [vmem:[%s572 + $0x30] sm:$0xff] %v645
                  %v647 = vld [vmem:[%s571 + $0x40] sm:$0xff]
                  %648 = vst [vmem:[%s572 + $0x38] sm:$0xff] %v647
                  %v649 = vld [vmem:[%s571 + $0x48] sm:$0xff]
                  %650 = vst [vmem:[%s572 + $0x40] sm:$0xff] %v649
                  %v651 = vld [vmem:[%s571 + $0x50] sm:$0xff]
                  %652 = vst [vmem:[%s572 + $0x48] sm:$0xff] %v651
                  %v653 = vld [vmem:[%s571 + $0x58] sm:$0xff]
                  %654 = vst [vmem:[%s572 + $0x50] sm:$0xff] %v653
                  %v655 = vld [vmem:[%s571 + $0x60] sm:$0xff]
                  %656 = vst [vmem:[%s572 + $0x58] sm:$0xff] %v655
                  %v657 = vld [vmem:[%s571 + $0x68] sm:$0xff]
                  %658 = vst [vmem:[%s572 + $0x60] sm:$0xff] %v657
                  %v659 = vld [vmem:[%s571 + $0x70] sm:$0xff]
                  %660 = vst [vmem:[%s572 + $0x68] sm:$0xff] %v659
                  %v661 = vld [vmem:[%s571 + $0x78] sm:$0xff]
                  %662 = vst [vmem:[%s572 + $0x70] sm:$0xff] %v661
                  %v663 = vld [vmem:[%s571 + $0x80] sm:$0xff]
                  %664 = vst [vmem:[%s572 + $0x78] sm:$0xff] %v663
                  %v665 = vld [vmem:[%s571 + $0x88] sm:$0xff]
                  %666 = vst [vmem:[%s572 + $0x80] sm:$0xff] %v665
                  %v667 = vld [vmem:[%s571 + $0x90] sm:$0xff]
                  %668 = vst [vmem:[%s572 + $0x88] sm:$0xff] %v667
                  %v669 = vld [vmem:[%s571 + $0x98] sm:$0xff]
                  %670 = vst [vmem:[%s572 + $0x90] sm:$0xff] %v669
                  %v671 = vld [vmem:[%s571 + $0xa0] sm:$0xff]
                  %672 = vst [vmem:[%s572 + $0x98] sm:$0xff] %v671
                  %v673 = vld [vmem:[%s571 + $0xa8] sm:$0xff]
                  %674 = vst [vmem:[%s572 + $0xa0] sm:$0xff] %v673
                  %v675 = vld [vmem:[%s571 + $0xb0] sm:$0xff]
                  %676 = vst [vmem:[%s572 + $0xa8] sm:$0xff] %v675
                  %v677 = vld [vmem:[%s571 + $0xb8] sm:$0xff]
                  %678 = vst [vmem:[%s572 + $0xb0] sm:$0xff] %v677
                  %v679 = vld [vmem:[%s571 + $0xc0] sm:$0xff]
                  %680 = vst [vmem:[%s572 + $0xb8] sm:$0xff] %v679
                  %v681 = vld [vmem:[%s571 + $0xc8] sm:$0xff]
                  %682 = vst [vmem:[%s572 + $0xc0] sm:$0xff] %v681
                  %v683 = vld [vmem:[%s571 + $0xd0] sm:$0xff]
                  %684 = vst [vmem:[%s572 + $0xc8] sm:$0xff] %v683
                  %v685 = vld [vmem:[%s571 + $0xd8] sm:$0xff]
                  %686 = vst [vmem:[%s572 + $0xd0] sm:$0xff] %v685
                  %v687 = vld [vmem:[%s571 + $0xe0] sm:$0xff]
                  %688 = vst [vmem:[%s572 + $0xd8] sm:$0xff] %v687
                  %v689 = vld [vmem:[%s571 + $0xe8] sm:$0xff]
                  %690 = vst [vmem:[%s572 + $0xe0] sm:$0xff] %v689
                  %v691 = vld [vmem:[%s571 + $0xf0] sm:$0xff]
                  %692 = vst [vmem:[%s572 + $0xe8] sm:$0xff] %v691
                  %v693 = vld [vmem:[%s571 + $0xf8] sm:$0xff]
                  %694 = vst [vmem:[%s572 + $0xf0] sm:$0xff] %v693
                  %v695 = vld [vmem:[%s571 + $0x100] sm:$0xff]
                  %696 = vst [vmem:[%s572 + $0xf8] sm:$0xff] %v695
                  %v697 = vld [vmem:[%s571 + $0x108] sm:$0xff]
                  %698 = vst [vmem:[%s572 + $0x100] sm:$0xff] %v697
                  %v699 = vld [vmem:[%s571 + $0x110] sm:$0xff]
                  %700 = vst [vmem:[%s572 + $0x108] sm:$0xff] %v699
                  %s701 = sadd.s32 1, %s570
                  %p702 = scmp.ge.s32.totalorder %s701, %s561
                  %s703 = scalar_select %p702, 0, %s701
                  %s704 = smul.u32 %s703, 256
                  %s705 = smul.u32 %s703, 256
                  %s706 = scalar_lea.vmem %s343, %s704
                  %s707 = scalar_lea.vmem %s333, %s705 [#allocation2]
                $region90: #{tpu_custom_call.1} parent=84 // loop_footer
                  %s567 = sadd.s32 %s565, 1
                $region91: #{tpu_custom_call.1} parent=84 // loop_footer_branch
                  %564 = sbr.rel target = $region87
                $region92: #{tpu_custom_call.1} parent=84 // loop_exit
                  _
                %s708 = sshrl.u32 %s560, 5
                %s709 = sand.u32 %s560, 31
                %s710 = smul.u32 %s708, 32
                %s711 = smul.u32 128, %s710
                %s712 = sshra.s32 %s711, 4
                %s713 = scalar_lea.vmem %s343, %s712
                %s714 = smul.u32 128, %s710
                %s715 = sshra.s32 %s714, 4
                %s716 = scalar_lea.vmem %s333, %s715 [#allocation2]
                // While loop
                $region93: #{tpu_custom_call.1} parent=84 // loop_pre_header
                  _
                $region94: #{tpu_custom_call.1} parent=84 // loop_header
                  %s720 = sphi 0, %s722
                  %p721 = scmp.ge.s32.totalorder %s720, %s709
                  %s725 = sphi 0, %s734
                  %s726 = sphi %s713, %s737
                  %s727 = sphi %s716, %s738
                $region95: #{tpu_custom_call.1} parent=84 // loop_header_branch
                  %724 = sbr.rel (%p721) target = $region99
                $region96: #{tpu_custom_call.1} parent=84 // loop_body
                  %v728 = vld [vmem:[%s726] sm:$0xff]
                  %729 = vst [vmem:[%s727] sm:$0xff] %v728
                  %v730 = vld [vmem:[%s726 + $0x18] sm:$0xff]
                  %731 = vst [vmem:[%s727 + $0x10] sm:$0xff] %v730
                  %s732 = sadd.s32 1, %s725
                  %p733 = scmp.ge.s32.totalorder %s732, %s709
                  %s734 = scalar_select %p733, 0, %s732
                  %s735 = smul.u32 %s734, 8
                  %s736 = smul.u32 %s734, 8
                  %s737 = scalar_lea.vmem %s713, %s735
                  %s738 = scalar_lea.vmem %s716, %s736 [#allocation2]
                $region97: #{tpu_custom_call.1} parent=84 // loop_footer
                  %s722 = sadd.s32 %s720, 1
                $region98: #{tpu_custom_call.1} parent=84 // loop_footer_branch
                  %719 = sbr.rel target = $region94
                $region99: #{tpu_custom_call.1} parent=84 // loop_exit
                  _
                %s739 = sshllo.u32 0, %s555
                loop: start=0, step=1, limit=1
                $region100: #{tpu_custom_call.1} parent=84 // loop_pre_header
                  _
                $region101: #{tpu_custom_call.1} parent=84 // loop_header
                  %s741 = sphi 0, %s745
                  %p742 = scmp.ge.s32.totalorder %s741, 1
                  %s746 = sphi %s557, %s557
                  %s747 = sphi %s559, %s559
                $region102: #{tpu_custom_call.1} parent=84 // loop_header_branch
                  %744 = sbr.rel (%p742) target = $region106
                $region103: #{tpu_custom_call.1} parent=84 // loop_body
                  %v748 = vld [vmem:[%s746] sm:%s739]
                  %749 = vst [vmem:[%s747] sm:%s739] %v748
                  %v750 = vld [vmem:[%s746 + $0x18] sm:%s739]
                  %751 = vst [vmem:[%s747 + $0x10] sm:%s739] %v750
                $region104: #{tpu_custom_call.1} parent=84 // loop_footer
                  %s745 = sadd.s32 1, %s741
                $region105: #{tpu_custom_call.1} parent=84 // loop_footer_branch
                  %740 = sbr.rel target = $region101
                $region106: #{tpu_custom_call.1} parent=84 // loop_exit
                  _
              $region85: #{tpu_custom_call.1} parent=51 // pred_fallthru
                _
            $region52: #{tpu_custom_call.1} parent=47 // pred_fallthru
              _
            // Predicated region
            $region53: #{tpu_custom_call.1} parent=47 // pred_check
              %p352 = pneg %p348
            $region54: #{tpu_custom_call.1} parent=47 // pred_check_branch
              %354 = sbr.rel (%p352) target = $region56
            $region55: #{tpu_custom_call.1} parent=47 // pred_region
              %s355 = sshllo.u32 0, %s344
              loop: start=0, step=1, limit=1
              $region57: #{tpu_custom_call.1} parent=55 // loop_pre_header
                _
              $region58: #{tpu_custom_call.1} parent=55 // loop_header
                %s357 = sphi 0, %s361
                %p358 = scmp.ge.s32.totalorder %s357, 1
                %s362 = sphi %s343, %s343
                %s363 = sphi %s333, %s333
              $region59: #{tpu_custom_call.1} parent=55 // loop_header_branch
                %360 = sbr.rel (%p358) target = $region63
              $region60: #{tpu_custom_call.1} parent=55 // loop_body
                %v364 = vld [vmem:[%s362] sm:%s355]
                %365 = vst [vmem:[%s363] sm:%s355] %v364
                %v366 = vld [vmem:[%s362 + $0x18] sm:%s355]
                %367 = vst [vmem:[%s363 + $0x10] sm:%s355] %v366
              $region61: #{tpu_custom_call.1} parent=55 // loop_footer
                %s361 = sadd.s32 1, %s357
              $region62: #{tpu_custom_call.1} parent=55 // loop_footer_branch
                %356 = sbr.rel target = $region58
              $region63: #{tpu_custom_call.1} parent=55 // loop_exit
                _
            $region56: #{tpu_custom_call.1} parent=47 // pred_fallthru
              _
          $region48: #{tpu_custom_call.1} parent=43 // pred_fallthru
            _
          %752 = vnop
        $region44: #{tpu_custom_call.1} parent=39 // pred_fallthru
          _
        // Predicated region
        $region107: #{tpu_custom_call.1} parent=39 // pred_check
          %p753 = pneg %p94
        $region108: #{tpu_custom_call.1} parent=39 // pred_check_branch
          %755 = sbr.rel (%p753) target = $region110
        $region109: #{tpu_custom_call.1} parent=39 // pred_region
          %s756 = sand.u32 %s84, 1
          %s757 = scalar_lea.sflag [#allocation4], %s756
          %s758 = sand.u32 %s84, 1
          %s759 = smul.addr %s758, 16
          %s760 = scalar_lea.vmem [#allocation3], %s759
          %s761 = smul.u32 %s32, 2
          %s762 = ssub.s32 %s761, 1
          %p763 = scmp.gt.s32.totalorder %s762, 0
          %s764 = scalar_select %p763, %s762, 0
          %s766 = ssub.s32 256, 256
          %767 = vsyncadd %s757, %s766
          %s768 = smul.addr %s31, 6
          %s769 = sadd.s32 %s764, %s768
          %s770 = smul.addr %s769, 128
          %s771 = scalar_lea.hbm %s1, %s770
          %s772 = sshll.u32 %s760, 4
          %s773 = int_to_ptr.vmem [resolvable:$true] %s772
          %778 = dma.hbm_to_vmem [thread:$0]  %s771, 256, %s773, %s757, 384, 128, 8
        $region110: #{tpu_custom_call.1} parent=39 // pred_fallthru
          _
        // Predicated region
        $region111: #{tpu_custom_call.1} parent=39 // pred_check
          %p779 = pneg %p130
        $region112: #{tpu_custom_call.1} parent=39 // pred_check_branch
          %781 = sbr.rel (%p779) target = $region114
        $region113: #{tpu_custom_call.1} parent=39 // pred_region
          %s782 = sand.u32 %s120, 1
          %s783 = scalar_lea.sflag [#allocation7], %s782
          %s784 = sand.u32 %s120, 1
          %s785 = smul.addr %s784, 16
          %s786 = scalar_lea.vmem [#allocation6], %s785
          %s787 = sadd.s32 %s32, 1
          %s788 = smul.u32 %s787, 2
          %p789 = scmp.lt.s32.totalorder %s788, 2
          %s790 = scalar_select %p789, %s788, 2
          %s792 = ssub.s32 256, 256
          %793 = vsyncadd %s783, %s792
          %s794 = smul.addr %s31, 6
          %s795 = sadd.s32 %s790, %s794
          %s796 = smul.addr %s795, 128
          %s797 = scalar_lea.hbm %s2, %s796
          %s798 = sshll.u32 %s786, 4
          %s799 = int_to_ptr.vmem [resolvable:$true] %s798
          %804 = dma.hbm_to_vmem [thread:$0]  %s797, 256, %s799, %s783, 384, 128, 8
        $region114: #{tpu_custom_call.1} parent=39 // pred_fallthru
          _
      $region40: #{tpu_custom_call.1} parent=5 // pred_fallthru
        _
      %p805 = scmp.le.s32.totalorder 1, %s24
      %p806 = scmp.lt.s32.totalorder %s24, 5
      %p807 = pnand %p805, %p806
      %p808 = pneg %p807
      // Predicated region
      $region115: #{tpu_custom_call.1} parent=5 // pred_check
        _
      $region116: #{tpu_custom_call.1} parent=5 // pred_check_branch
        %810 = sbr.rel (%p807) target = $region118
      $region117: #{tpu_custom_call.1} parent=5 // pred_region
        %s811 = ssub.s32 %s24, 1
        %s812 = sand.u32 %s51, 1
        %s813 = sand.u32 %s51, 1
        %s814 = smul.addr %s813, 32
        %s815 = scalar_lea.vmem [#allocation2], %s814
        // Predicated region
        $region119: #{tpu_custom_call.1} parent=117 // pred_check
          %p816 = pneg %p64
        $region120: #{tpu_custom_call.1} parent=117 // pred_check_branch
          %818 = sbr.rel (%p816) target = $region122
        $region121: #{tpu_custom_call.1} parent=117 // pred_region
          _
        $region122: #{tpu_custom_call.1} parent=117 // pred_fallthru
          _
        %s819 = sand.u32 %s87, 1
        %s820 = scalar_lea.sflag [#allocation4], %s819
        %s821 = sand.u32 %s87, 1
        %s822 = smul.addr %s821, 16
        %s823 = scalar_lea.vmem [#allocation3], %s822
        // Predicated region
        $region123: #{tpu_custom_call.1} parent=117 // pred_check
          %p824 = pneg %p100
        $region124: #{tpu_custom_call.1} parent=117 // pred_check_branch
          %826 = sbr.rel (%p824) target = $region126
        $region125: #{tpu_custom_call.1} parent=117 // pred_region
          %827 = dma.done %s820, 256
        $region126: #{tpu_custom_call.1} parent=117 // pred_fallthru
          _
        %s828 = sand.u32 %s123, 1
        %s829 = scalar_lea.sflag [#allocation7], %s828
        %s830 = sand.u32 %s123, 1
        %s831 = smul.addr %s830, 16
        %s832 = scalar_lea.vmem [#allocation6], %s831
        // Predicated region
        $region127: #{tpu_custom_call.1} parent=117 // pred_check
          %p833 = pneg %p136
        $region128: #{tpu_custom_call.1} parent=117 // pred_check_branch
          %835 = sbr.rel (%p833) target = $region130
        $region129: #{tpu_custom_call.1} parent=117 // pred_region
          %836 = dma.done %s829, 256
        $region130: #{tpu_custom_call.1} parent=117 // pred_fallthru
          _
        %s837 = sand.u32 %s51, 1
        %s838 = sand.u32 %s51, 1
        %s839 = smul.addr %s838, 32
        %s840 = scalar_lea.vmem [#allocation2], %s839
        %p841 = pneg %p64
        %p842 = pneg %p61
        %s843 = sand.u32 %s87, 1
        %s844 = scalar_lea.sflag [#allocation4], %s843
        %s845 = sand.u32 %s87, 1
        %s846 = smul.addr %s845, 16
        %s847 = scalar_lea.vmem [#allocation3], %s846
        %p848 = pneg %p100
        %p849 = pneg %p97
        %s850 = sand.u32 %s123, 1
        %s851 = scalar_lea.sflag [#allocation7], %s850
        %s852 = sand.u32 %s123, 1
        %s853 = smul.addr %s852, 16
        %s854 = scalar_lea.vmem [#allocation6], %s853
        %p855 = pneg %p136
        %p856 = pneg %p133
        %p857 = pneg %p157
        %p858 = pneg %p154
        %p859 = pneg %p178
        %p860 = pneg %p175
        %p861 = pneg %p199
        %p862 = pneg %p196
        %p863 = pneg %p220
        %p864 = pneg %p217
        %p865 = pneg %p241
        %p866 = pneg %p238
        %p867 = pneg %p262
        %p868 = pneg %p259
        %p869 = pneg %p290
        %p870 = pneg %p287
        %s871 = sand.u32 %s277, 1
        %s872 = scalar_lea.sflag [#allocation5], %s871
        %s873 = sand.u32 %s277, 1
        %s874 = smul.addr %s873, 48
        %s875 = scalar_lea.vmem [#allocation8], %s874
        %s876 = smul.u32 2, %s34
        %s877 = ssub.s32 3, %s876
        %p878 = scmp.lt.s32.totalorder %s877, 2
        %s879 = scalar_select %p878, %s877, 2
        %s880 = smul.u32 256, %s879
        %s881 = smul.u32 %s34, 2
        %s882 = ssub.s32 %s881, 1
        %p883 = scmp.gt.s32.totalorder %s882, 0
        %s884 = scalar_select %p883, %s882, 0
        %s885 = sadd.s32 %s34, 1
        %s886 = smul.u32 %s885, 2
        %p887 = scmp.lt.s32.totalorder %s886, 2
        %s888 = scalar_select %p887, %s886, 2
        %s889 = smul.u32 2, %s34
        %s890 = ssub.s32 3, %s889
        %p891 = scmp.lt.s32.totalorder %s890, 2
        %s892 = scalar_select %p891, %s890, 2
        %s893 = smul.u32 384, %s892
        %v895 = vld [vmem:[%s3] sm:$0xff]
        %v896 = vld [vmem:[%s3 + $0x8] sm:$0xff]
        %v897 = vld [vmem:[%s4] sm:$0xff]
        %v898 = vld [vmem:[%s4 + $0x8] sm:$0xff]
        %v899 = vld [vmem:[%s6] sm:$0xff]
        %v900 = vld [vmem:[%s6 + $0x8] sm:$0xff]
        %v901 = vld [vmem:[%s6 + $0x10] sm:$0xff]
        %v902 = vld [vmem:[%s6 + $0x18] sm:$0xff]
        %v903 = vld [vmem:[%s7] sm:$0xff]
        %v904 = vld [vmem:[%s7 + $0x8] sm:$0xff]
        %v905 = vld [vmem:[%s7 + $0x10] sm:$0xff]
        %v906 = vld [vmem:[%s7 + $0x18] sm:$0xff]
        %v907 = vld [vmem:[%s5] sm:$0xf]
        %v908 = vld [vmem:[%s5 + $0x4] sm:$0xf]
        %v909 = vld [vmem:[%s5 + $0x8] sm:$0xf]
        %v910 = vld [vmem:[%s5 + $0xc] sm:$0xf]
        %v911 = vld [vmem:[%s8] sm:$0xf]
        %v912 = vld [vmem:[%s8 + $0x4] sm:$0xf]
        %v913 = vld [vmem:[%s8 + $0x8] sm:$0xf]
        %v914 = vld [vmem:[%s815] sm:$0xff]
        %v915 = vld [vmem:[%s815 + $0x8] sm:$0xff]
        %v916 = vld [vmem:[%s815 + $0x10] sm:$0xff]
        %v917 = vld [vmem:[%s815 + $0x18] sm:$0xff]
        %919 = vset.pattern.permute.xlu0 0
        %920 = vperm.xlu0 %919, %v895
        %v921 = vpop.permute.xlu0 %920
        %924 = vset.pattern.permute.xlu0 0
        %925 = vperm.xlu0 %924, %v896
        %v926 = vpop.permute.xlu0 %925
        %v928 = vmul.f32 %v914, %v921
        %v929 = vmul.f32 %v915, %v921
        %v930 = vmul.f32 %v916, %v926
        %v931 = vmul.f32 %v917, %v926
        %933 = vset.pattern.permute.xlu0 0
        %934 = vperm.xlu0 %933, %v897
        %v935 = vpop.permute.xlu0 %934
        %938 = vset.pattern.permute.xlu0 0
        %939 = vperm.xlu0 %938, %v898
        %v940 = vpop.permute.xlu0 %939
        %v942 = vadd.f32 %v928, %v935
        %v943 = vadd.f32 %v929, %v935
        %v944 = vadd.f32 %v930, %v940
        %v945 = vadd.f32 %v931, %v940
        %v946 = vmax.f32 %v942, 0.0
        %v947 = vmax.f32 %v943, 0.0
        %v948 = vmax.f32 %v944, 0.0
        %v949 = vmax.f32 %v945, 0.0
        %v950 = vpack.c.bf16 %v948, %v946
        %v951 = vpack.c.bf16 %v949, %v947
        %v956 = vunpack.c.l.b16 %v907
        %v957 = vunpack.c.l.b16 %v908
        %v958 = vunpack.c.l.b16 %v909
        %v959 = vunpack.c.l.b16 %v910
        %v960 = vpack.c.b16 %v957, %v956
        %v961 = vpack.c.b16 %v959, %v958
        %vm962 = vcmask 130048
        %v964 = vsel %vm962, %v960, 0
        %v967 = vsel %vm962, %v961, 0
        %969 = vmatprep.subr.bf16.mxu0 %v951
        %970 = vmatpush1.bf16.msra.mxu0 %v950
        %971 = vmatprep.subr.bf16.mxu0 0
        %972 = vmatpush1.bf16.msra.mxu0 0
        %973 = vmatprep.subr.bf16.mxu0 0
        %974 = vmatpush1.bf16.msra.mxu0 0
        %975 = vmatprep.subr.bf16.mxu0 0
        %976 = vmatpush1.bf16.msra.mxu0 0
        %977 = vmatprep.subr.bf16.mxu0 0
        %978 = vmatpush1.bf16.msra.mxu0 0
        %979 = vmatprep.subr.bf16.mxu0 0
        %980 = vmatpush1.bf16.msra.mxu0 0
        %981 = vmatprep.subr.bf16.mxu0 0
        %982 = vmatpush1.bf16.msra.mxu0 0
        %983 = vmatprep.subr.bf16.mxu0 0
        %984 = vmatpush1.bf16.msra.mxu0 0
        %985 = vmatprep.subr.bf16.mxu0 0
        %986 = vmatpush1.bf16.msra.mxu0 0
        %987 = vmatprep.subr.bf16.mxu0 0
        %988 = vmatpush1.bf16.msra.mxu0 0
        %989 = vmatprep.subr.bf16.mxu0 0
        %990 = vmatpush1.bf16.msra.mxu0 0
        %991 = vmatprep.subr.bf16.mxu0 0
        %992 = vmatpush1.bf16.msra.mxu0 0
        %993 = vmatprep.subr.bf16.mxu0 0
        %994 = vmatpush1.bf16.msra.mxu0 0
        %995 = vmatprep.subr.bf16.mxu0 0
        %996 = vmatpush1.bf16.msra.mxu0 0
        %997 = vmatprep.subr.bf16.mxu0 0
        %998 = vmatpush1.bf16.msra.mxu0 0
        %999 = vmatprep.subr.bf16.mxu0 0
        %1000 = vmatpush1.bf16.msra.mxu0 0
        %1001 = vmatprep.mubr.bf16.mxu0 0
        %1002 = vmatmul.mubr.bf16.gmra.mrb[0].mxu0 %v964
        %v1003 = vpop.f32.mrb[0].mxu0
        %v1004 = vadd.f32 0.0, %v1003
        %v1005 = vpop.f32.mrb[0].mxu0
        %v1006 = vadd.f32 0.0, %v1005
        %v1007 = vpop.f32.mrb[0].mxu0
        %v1008 = vadd.f32 0.0, %v1007
        %v1009 = vpop.f32.mrb[0].mxu0
        %v1010 = vadd.f32 0.0, %v1009
        %1011 = vmatprep.mubr.bf16.mxu0 0
        %1012 = vmatmul.mubr.bf16.gmra.mrb[0].mxu0 %v967
        %v1013 = vpop.f32.mrb[0].mxu0
        %v1014 = vadd.f32 0.0, %v1013
        %v1015 = vpop.f32.mrb[0].mxu0
        %v1016 = vadd.f32 0.0, %v1015
        %v1017 = vpop.f32.mrb[0].mxu0
        %v1018 = vadd.f32 0.0, %v1017
        %v1019 = vpop.f32.mrb[0].mxu0
        %v1020 = vadd.f32 0.0, %v1019
        %1021 = vdwg.mxu0
        %v1022 = vld [vmem:[%s823] sm:$0xff]
        %v1023 = vld [vmem:[%s823 + $0x8] sm:$0xff]
        %v1024 = vmul.f32 %v1022, %v921
        %v1025 = vmul.f32 %v1023, %v926
        %v1026 = vadd.f32 %v1024, %v935
        %v1027 = vadd.f32 %v1025, %v940
        %v1028 = vmax.f32 %v1026, 0.0
        %v1029 = vmax.f32 %v1027, 0.0
        %v1030 = vpack.c.bf16 %v1029, %v1028
        %1031 = vmatprep.subr.bf16.mxu0 0
        %1032 = vmatpush1.bf16.msra.mxu0 %v1030
        %1033 = vmatprep.subr.bf16.mxu0 0
        %1034 = vmatpush1.bf16.msra.mxu0 0
        %1035 = vmatprep.subr.bf16.mxu0 0
        %1036 = vmatpush1.bf16.msra.mxu0 0
        %1037 = vmatprep.subr.bf16.mxu0 0
        %1038 = vmatpush1.bf16.msra.mxu0 0
        %1039 = vmatprep.subr.bf16.mxu0 0
        %1040 = vmatpush1.bf16.msra.mxu0 0
        %1041 = vmatprep.subr.bf16.mxu0 0
        %1042 = vmatpush1.bf16.msra.mxu0 0
        %1043 = vmatprep.subr.bf16.mxu0 0
        %1044 = vmatpush1.bf16.msra.mxu0 0
        %1045 = vmatprep.subr.bf16.mxu0 0
        %1046 = vmatpush1.bf16.msra.mxu0 0
        %1047 = vmatprep.subr.bf16.mxu0 0
        %1048 = vmatpush1.bf16.msra.mxu0 0
        %1049 = vmatprep.subr.bf16.mxu0 0
        %1050 = vmatpush1.bf16.msra.mxu0 0
        %1051 = vmatprep.subr.bf16.mxu0 0
        %1052 = vmatpush1.bf16.msra.mxu0 0
        %1053 = vmatprep.subr.bf16.mxu0 0
        %1054 = vmatpush1.bf16.msra.mxu0 0
        %1055 = vmatprep.subr.bf16.mxu0 0
        %1056 = vmatpush1.bf16.msra.mxu0 0
        %1057 = vmatprep.subr.bf16.mxu0 0
        %1058 = vmatpush1.bf16.msra.mxu0 0
        %1059 = vmatprep.subr.bf16.mxu0 0
        %1060 = vmatpush1.bf16.msra.mxu0 0
        %1061 = vmatprep.subr.bf16.mxu0 0
        %1062 = vmatpush1.bf16.msra.mxu0 0
        %1063 = vmatprep.mubr.bf16.mxu0 0
        %1064 = vmatmul.mubr.bf16.gmra.mrb[0].mxu0 %v964
        %v1065 = vpop.f32.mrb[0].mxu0
        %v1066 = vadd.f32 0.0, %v1065
        %v1067 = vpop.f32.mrb[0].mxu0
        %v1068 = vpop.f32.mrb[0].mxu0
        %v1069 = vadd.f32 0.0, %v1068
        %v1070 = vpop.f32.mrb[0].mxu0
        %1071 = vmatprep.mubr.bf16.mxu0 0
        %1072 = vmatmul.mubr.bf16.gmra.mrb[0].mxu0 %v967
        %v1073 = vpop.f32.mrb[0].mxu0
        %v1074 = vadd.f32 0.0, %v1073
        %v1075 = vpop.f32.mrb[0].mxu0
        %v1076 = vpop.f32.mrb[0].mxu0
        %v1077 = vadd.f32 0.0, %v1076
        %v1078 = vpop.f32.mrb[0].mxu0
        %1079 = vdwg.mxu0
        %v1080 = vld [vmem:[%s832] sm:$0xff]
        %v1081 = vld [vmem:[%s832 + $0x8] sm:$0xff]
        %v1082 = vmul.f32 %v1080, %v921
        %v1083 = vmul.f32 %v1081, %v926
        %v1084 = vadd.f32 %v1082, %v935
        %v1085 = vadd.f32 %v1083, %v940
        %v1086 = vmax.f32 %v1084, 0.0
        %v1087 = vmax.f32 %v1085, 0.0
        %v1088 = vpack.c.bf16 %v1087, %v1086
        %1089 = vmatprep.subr.bf16.mxu0 0
        %1090 = vmatpush1.bf16.msra.mxu0 %v1088
        %1091 = vmatprep.subr.bf16.mxu0 0
        %1092 = vmatpush1.bf16.msra.mxu0 0
        %1093 = vmatprep.subr.bf16.mxu0 0
        %1094 = vmatpush1.bf16.msra.mxu0 0
        %1095 = vmatprep.subr.bf16.mxu0 0
        %1096 = vmatpush1.bf16.msra.mxu0 0
        %1097 = vmatprep.subr.bf16.mxu0 0
        %1098 = vmatpush1.bf16.msra.mxu0 0
        %1099 = vmatprep.subr.bf16.mxu0 0
        %1100 = vmatpush1.bf16.msra.mxu0 0
        %1101 = vmatprep.subr.bf16.mxu0 0
        %1102 = vmatpush1.bf16.msra.mxu0 0
        %1103 = vmatprep.subr.bf16.mxu0 0
        %1104 = vmatpush1.bf16.msra.mxu0 0
        %1105 = vmatprep.subr.bf16.mxu0 0
        %1106 = vmatpush1.bf16.msra.mxu0 0
        %1107 = vmatprep.subr.bf16.mxu0 0
        %1108 = vmatpush1.bf16.msra.mxu0 0
        %1109 = vmatprep.subr.bf16.mxu0 0
        %1110 = vmatpush1.bf16.msra.mxu0 0
        %1111 = vmatprep.subr.bf16.mxu0 0
        %1112 = vmatpush1.bf16.msra.mxu0 0
        %1113 = vmatprep.subr.bf16.mxu0 0
        %1114 = vmatpush1.bf16.msra.mxu0 0
        %1115 = vmatprep.subr.bf16.mxu0 0
        %1116 = vmatpush1.bf16.msra.mxu0 0
        %1117 = vmatprep.subr.bf16.mxu0 0
        %1118 = vmatpush1.bf16.msra.mxu0 0
        %1119 = vmatprep.subr.bf16.mxu0 0
        %1120 = vmatpush1.bf16.msra.mxu0 0
        %1121 = vmatprep.mubr.bf16.mxu0 0
        %1122 = vmatmul.mubr.bf16.gmra.mrb[0].mxu0 %v964
        %v1123 = vpop.f32.mrb[0].mxu0
        %v1124 = vadd.f32 0.0, %v1123
        %v1125 = vpop.f32.mrb[0].mxu0
        %v1126 = vpop.f32.mrb[0].mxu0
        %v1127 = vadd.f32 0.0, %v1126
        %v1128 = vpop.f32.mrb[0].mxu0
        %1129 = vmatprep.mubr.bf16.mxu0 0
        %1130 = vmatmul.mubr.bf16.gmra.mrb[0].mxu0 %v967
        %v1131 = vpop.f32.mrb[0].mxu0
        %v1132 = vadd.f32 0.0, %v1131
        %v1133 = vpop.f32.mrb[0].mxu0
        %v1134 = vpop.f32.mrb[0].mxu0
        %v1135 = vadd.f32 0.0, %v1134
        %v1136 = vpop.f32.mrb[0].mxu0
        %1137 = vdwg.mxu0
        %v1138 = vlaneseq
        %v1139 = vand.u32 %v1138, 127
        %v1140 = vadd.s32 %v1139, 128
        %s1141 = smul.u32 %s34, 256
        %s1142 = ssub.s32 %s1141, 128
        %v1143 = vstv %s1142
        %v1144 = vadd.s32 %v1143, %v1139
        %1146 = vset.pattern.permute.xlu0 0
        %1147 = vperm.xlu0 %1146, %v899
        %v1148 = vpop.permute.xlu0 %1147
        %1151 = vset.pattern.permute.xlu0 0
        %1152 = vperm.xlu0 %1151, %v900
        %v1153 = vpop.permute.xlu0 %1152
        %1156 = vset.pattern.permute.xlu0 0
        %1157 = vperm.xlu0 %1156, %v901
        %v1158 = vpop.permute.xlu0 %1157
        %1161 = vset.pattern.permute.xlu0 0
        %1162 = vperm.xlu0 %1161, %v902
        %v1163 = vpop.permute.xlu0 %1162
        %v1165 = vmul.f32 %v1066, %v1148
        %v1166 = vmul.f32 %v1069, %v1153
        %v1167 = vmul.f32 %v1074, %v1158
        %v1168 = vmul.f32 %v1077, %v1163
        %1170 = vset.pattern.permute.xlu0 0
        %1171 = vperm.xlu0 %1170, %v903
        %v1172 = vpop.permute.xlu0 %1171
        %1175 = vset.pattern.permute.xlu0 0
        %1176 = vperm.xlu0 %1175, %v904
        %v1177 = vpop.permute.xlu0 %1176
        %1180 = vset.pattern.permute.xlu0 0
        %1181 = vperm.xlu0 %1180, %v905
        %v1182 = vpop.permute.xlu0 %1181
        %1185 = vset.pattern.permute.xlu0 0
        %1186 = vperm.xlu0 %1185, %v906
        %v1187 = vpop.permute.xlu0 %1186
        %v1189 = vadd.f32 %v1165, %v1172
        %v1190 = vadd.f32 %v1166, %v1177
        %v1191 = vadd.f32 %v1167, %v1182
        %v1192 = vadd.f32 %v1168, %v1187
        %v1193 = vmax.f32 %v1189, 0.0
        %v1194 = vmax.f32 %v1190, 0.0
        %v1195 = vmax.f32 %v1191, 0.0
        %v1196 = vmax.f32 %v1192, 0.0
        %vm1197 = vcmp.ge.s32.totalorder %v1144, 0
        %vm1198 = vcmp.lt.s32.totalorder %v1144, 300
        %vm1199 = vmand %vm1197, %vm1198
        %v1200 = vsel %vm1199, 1, 0
        %vm1201 = vcmp.eq.s32.totalorder %v1200, 1
        %v1202 = vsel %vm1201, %v1193, 0.0
        %v1203 = vsel %vm1201, %v1194, 0.0
        %v1204 = vsel %vm1201, %v1195, 0.0
        %v1205 = vsel %vm1201, %v1196, 0.0
        %v1206 = vstv %s1141
        %v1207 = vadd.s32 %v1206, %v1139
        %v1208 = vadd.s32 %v1206, %v1140
        %v1209 = vmul.f32 %v1004, %v1148
        %v1210 = vmul.f32 %v1006, %v1148
        %v1211 = vmul.f32 %v1008, %v1153
        %v1212 = vmul.f32 %v1010, %v1153
        %v1213 = vmul.f32 %v1014, %v1158
        %v1214 = vmul.f32 %v1016, %v1158
        %v1215 = vmul.f32 %v1018, %v1163
        %v1216 = vmul.f32 %v1020, %v1163
        %v1217 = vadd.f32 %v1209, %v1172
        %v1218 = vadd.f32 %v1210, %v1172
        %v1219 = vadd.f32 %v1211, %v1177
        %v1220 = vadd.f32 %v1212, %v1177
        %v1221 = vadd.f32 %v1213, %v1182
        %v1222 = vadd.f32 %v1214, %v1182
        %v1223 = vadd.f32 %v1215, %v1187
        %v1224 = vadd.f32 %v1216, %v1187
        %v1225 = vmax.f32 %v1217, 0.0
        %v1226 = vmax.f32 %v1218, 0.0
        %v1227 = vmax.f32 %v1219, 0.0
        %v1228 = vmax.f32 %v1220, 0.0
        %v1229 = vmax.f32 %v1221, 0.0
        %v1230 = vmax.f32 %v1222, 0.0
        %v1231 = vmax.f32 %v1223, 0.0
        %v1232 = vmax.f32 %v1224, 0.0
        %vm1233 = vcmp.ge.s32.totalorder %v1207, 0
        %vm1234 = vcmp.ge.s32.totalorder %v1208, 0
        %vm1235 = vcmp.lt.s32.totalorder %v1207, 300
        %vm1236 = vcmp.lt.s32.totalorder %v1208, 300
        %vm1237 = vmand %vm1233, %vm1235
        %vm1238 = vmand %vm1234, %vm1236
        %v1239 = vsel %vm1237, 1, 0
        %v1240 = vsel %vm1238, 1, 0
        %vm1241 = vcmp.eq.s32.totalorder %v1239, 1
        %vm1242 = vcmp.eq.s32.totalorder %v1240, 1
        %v1243 = vsel %vm1241, %v1225, 0.0
        %v1244 = vsel %vm1242, %v1226, 0.0
        %v1245 = vsel %vm1241, %v1227, 0.0
        %v1246 = vsel %vm1242, %v1228, 0.0
        %v1247 = vsel %vm1241, %v1229, 0.0
        %v1248 = vsel %vm1242, %v1230, 0.0
        %v1249 = vsel %vm1241, %v1231, 0.0
        %v1250 = vsel %vm1242, %v1232, 0.0
        %s1251 = sadd.s32 %s34, 1
        %s1252 = smul.u32 %s1251, 256
        %v1253 = vstv %s1252
        %v1254 = vadd.s32 %v1253, %v1139
        %v1255 = vmul.f32 %v1124, %v1148
        %v1256 = vmul.f32 %v1127, %v1153
        %v1257 = vmul.f32 %v1132, %v1158
        %v1258 = vmul.f32 %v1135, %v1163
        %v1259 = vadd.f32 %v1255, %v1172
        %v1260 = vadd.f32 %v1256, %v1177
        %v1261 = vadd.f32 %v1257, %v1182
        %v1262 = vadd.f32 %v1258, %v1187
        %v1263 = vmax.f32 %v1259, 0.0
        %v1264 = vmax.f32 %v1260, 0.0
        %v1265 = vmax.f32 %v1261, 0.0
        %v1266 = vmax.f32 %v1262, 0.0
        %vm1267 = vcmp.ge.s32.totalorder %v1254, 0
        %vm1268 = vcmp.lt.s32.totalorder %v1254, 300
        %vm1269 = vmand %vm1267, %vm1268
        %v1270 = vsel %vm1269, 1, 0
        %vm1271 = vcmp.eq.s32.totalorder %v1270, 1
        %v1272 = vsel %vm1271, %v1263, 0.0
        %v1273 = vsel %vm1271, %v1264, 0.0
        %v1274 = vsel %vm1271, %v1265, 0.0
        %v1275 = vsel %vm1271, %v1266, 0.0
        %v1276 = vpack.c.bf16 %v1203, %v1202
        %v1277 = vpack.c.bf16 %v1245, %v1243
        %v1278 = vpack.c.bf16 %v1246, %v1244
        %v1279 = vpack.c.bf16 %v1273, %v1272
        %v1280 = vpack.c.bf16 %v1205, %v1204
        %v1281 = vpack.c.bf16 %v1249, %v1247
        %v1282 = vpack.c.bf16 %v1250, %v1248
        %v1283 = vpack.c.bf16 %v1275, %v1274
        %v1287 = vunpack.c.l.b16 %v911
        %v1288 = vunpack.c.l.b16 %v912
        %v1289 = vunpack.c.l.b16 %v913
        %v1290 = vpack.c.b16 %v1288, %v1287
        %v1291 = vpack.c.b16 %v1289, %v1289
        %vm1292 = vcmask 261120
        %v1294 = vsel %vm1292, %v1290, 0
        %v1297 = vsel %vm1292, %v1291, 0
        %1299 = vmatprep.subr.bf16.mxu0 %v1277
        %1300 = vmatpush1.bf16.msra.mxu0 %v1276
        %1301 = vmatprep.subr.bf16.mxu0 %v1281
        %1302 = vmatpush1.bf16.msra.mxu0 %v1280
        %1303 = vmatprep.subr.bf16.mxu0 0
        %1304 = vmatpush1.bf16.msra.mxu0 0
        %1305 = vmatprep.subr.bf16.mxu0 0
        %1306 = vmatpush1.bf16.msra.mxu0 0
        %1307 = vmatprep.subr.bf16.mxu0 0
        %1308 = vmatpush1.bf16.msra.mxu0 0
        %1309 = vmatprep.subr.bf16.mxu0 0
        %1310 = vmatpush1.bf16.msra.mxu0 0
        %1311 = vmatprep.subr.bf16.mxu0 0
        %1312 = vmatpush1.bf16.msra.mxu0 0
        %1313 = vmatprep.subr.bf16.mxu0 0
        %1314 = vmatpush1.bf16.msra.mxu0 0
        %1315 = vmatprep.subr.bf16.mxu0 0
        %1316 = vmatpush1.bf16.msra.mxu0 0
        %1317 = vmatprep.subr.bf16.mxu0 0
        %1318 = vmatpush1.bf16.msra.mxu0 0
        %1319 = vmatprep.subr.bf16.mxu0 0
        %1320 = vmatpush1.bf16.msra.mxu0 0
        %1321 = vmatprep.subr.bf16.mxu0 0
        %1322 = vmatpush1.bf16.msra.mxu0 0
        %1323 = vmatprep.subr.bf16.mxu0 0
        %1324 = vmatpush1.bf16.msra.mxu0 0
        %1325 = vmatprep.subr.bf16.mxu0 0
        %1326 = vmatpush1.bf16.msra.mxu0 0
        %1327 = vmatprep.subr.bf16.mxu0 0
        %1328 = vmatpush1.bf16.msra.mxu0 0
        %1329 = vmatprep.subr.bf16.mxu0 0
        %1330 = vmatpush1.bf16.msra.mxu0 0
        %1331 = vmatprep.mubr.bf16.mxu0 0
        %1332 = vmatmul.mubr.bf16.gmra.mrb[0].mxu0 %v1294
        %v1333 = vpop.f32.mrb[0].mxu0
        %v1334 = vadd.f32 0.0, %v1333
        %v1335 = vpop.f32.mrb[0].mxu0
        %v1336 = vadd.f32 0.0, %v1335
        %v1337 = vpop.f32.mrb[0].mxu0
        %v1338 = vpop.f32.mrb[0].mxu0
        %v1339 = vadd.f32 0.0, %v1338
        %1340 = vmatprep.mubr.bf16.mxu0 0
        %1341 = vmatmul.mubr.bf16.gmra.mrb[0].mxu0 %v1297
        %v1342 = vpop.f32.mrb[0].mxu0
        %v1343 = vpop.f32.mrb[0].mxu0
        %v1344 = vadd.f32 0.0, %v1343
        %v1345 = vpop.f32.mrb[0].mxu0
        %v1346 = vpop.f32.mrb[0].mxu0
        %1347 = vdwg.mxu0
        %1348 = vmatprep.subr.bf16.mxu0 %v1279
        %1349 = vmatpush1.bf16.msra.mxu0 %v1278
        %1350 = vmatprep.subr.bf16.mxu0 %v1283
        %1351 = vmatpush1.bf16.msra.mxu0 %v1282
        %1352 = vmatprep.subr.bf16.mxu0 0
        %1353 = vmatpush1.bf16.msra.mxu0 0
        %1354 = vmatprep.subr.bf16.mxu0 0
        %1355 = vmatpush1.bf16.msra.mxu0 0
        %1356 = vmatprep.subr.bf16.mxu0 0
        %1357 = vmatpush1.bf16.msra.mxu0 0
        %1358 = vmatprep.subr.bf16.mxu0 0
        %1359 = vmatpush1.bf16.msra.mxu0 0
        %1360 = vmatprep.subr.bf16.mxu0 0
        %1361 = vmatpush1.bf16.msra.mxu0 0
        %1362 = vmatprep.subr.bf16.mxu0 0
        %1363 = vmatpush1.bf16.msra.mxu0 0
        %1364 = vmatprep.subr.bf16.mxu0 0
        %1365 = vmatpush1.bf16.msra.mxu0 0
        %1366 = vmatprep.subr.bf16.mxu0 0
        %1367 = vmatpush1.bf16.msra.mxu0 0
        %1368 = vmatprep.subr.bf16.mxu0 0
        %1369 = vmatpush1.bf16.msra.mxu0 0
        %1370 = vmatprep.subr.bf16.mxu0 0
        %1371 = vmatpush1.bf16.msra.mxu0 0
        %1372 = vmatprep.subr.bf16.mxu0 0
        %1373 = vmatpush1.bf16.msra.mxu0 0
        %1374 = vmatprep.subr.bf16.mxu0 0
        %1375 = vmatpush1.bf16.msra.mxu0 0
        %1376 = vmatprep.subr.bf16.mxu0 0
        %1377 = vmatpush1.bf16.msra.mxu0 0
        %1378 = vmatprep.subr.bf16.mxu0 0
        %1379 = vmatpush1.bf16.msra.mxu0 0
        %1380 = vmatprep.mubr.bf16.mxu0 0
        %1381 = vmatmul.mubr.bf16.gmra.mrb[0].mxu0 %v1294
        %v1382 = vpop.f32.mrb[0].mxu0
        %v1383 = vadd.f32 0.0, %v1382
        %v1384 = vpop.f32.mrb[0].mxu0
        %v1385 = vpop.f32.mrb[0].mxu0
        %v1386 = vadd.f32 0.0, %v1385
        %v1387 = vpop.f32.mrb[0].mxu0
        %1388 = vmatprep.mubr.bf16.mxu0 0
        %1389 = vmatmul.mubr.bf16.gmra.mrb[0].mxu0 %v1297
        %v1390 = vpop.f32.mrb[0].mxu0
        %v1391 = vadd.f32 0.0, %v1390
        %v1392 = vpop.f32.mrb[0].mxu0
        %v1393 = vadd.f32 0.0, %v1392
        %v1394 = vpop.f32.mrb[0].mxu0
        %v1395 = vpop.f32.mrb[0].mxu0
        %1396 = vdwg.mxu0
        %1400 = vrot.lane.b32.xlu0 %v1334, 1
        %v1401 = vpop.permute.xlu0 %1400
        %1402 = vrot.lane.b32.xlu0 %v1336, 1
        %v1403 = vpop.permute.xlu0 %1402
        %1404 = vrot.lane.b32.xlu0 %v1383, 1
        %v1405 = vpop.permute.xlu0 %1404
        %vm1406 = vcmask 7168
        %v1407 = vsel %vm1406, %v1401, %v1403
        %v1408 = vsel %vm1406, %v1403, %v1405
        %v1411 = vadd.f32 %v1339, %v1407
        %v1412 = vadd.f32 %v1386, %v1408
        %1416 = vrot.lane.b32.xlu0 %v1344, 127
        %v1417 = vpop.permute.xlu0 %1416
        %1418 = vrot.lane.b32.xlu0 %v1391, 127
        %v1419 = vpop.permute.xlu0 %1418
        %1420 = vrot.lane.b32.xlu0 %v1393, 127
        %v1421 = vpop.permute.xlu0 %1420
        %vm1422 = vcmask 1039360
        %v1423 = vsel %vm1422, %v1417, %v1419
        %v1424 = vsel %vm1422, %v1419, %v1421
        %v1427 = vadd.f32 %v1411, %v1423
        %v1428 = vadd.f32 %v1412, %v1424
        %1429 = vst [vmem:[%s875] sm:$0xff] %v914
        %1430 = vst [vmem:[%s875 + $0x8] sm:$0xff] %v915
        %1431 = vst [vmem:[%s875 + $0x10] sm:$0xff] %v916
        %1432 = vst [vmem:[%s875 + $0x18] sm:$0xff] %v917
        %1433 = vst [vmem:[%s875 + $0x20] sm:$0xff] %v1427
        %1434 = vst [vmem:[%s875 + $0x28] sm:$0xff] %v1428
        %s1435 = sand.u32 %s277, 1
        %s1436 = scalar_lea.sflag [#allocation5], %s1435
        %s1437 = sand.u32 %s277, 1
        %s1438 = smul.addr %s1437, 48
        %s1439 = scalar_lea.vmem [#allocation8], %s1438
        // Predicated region
        $region131: #{tpu_custom_call.1} parent=117 // pred_check
          %p1440 = pneg %p287
        $region132: #{tpu_custom_call.1} parent=117 // pred_check_branch
          %1442 = sbr.rel (%p1440) target = $region134
        $region133: #{tpu_custom_call.1} parent=117 // pred_region
          %s1443 = smul.u32 2, %s34
          %s1444 = ssub.s32 3, %s1443
          %p1445 = scmp.lt.s32.totalorder %s1444, 2
          %s1446 = scalar_select %p1445, %s1444, 2
          %s1447 = smul.u32 384, %s1446
          %s1449 = ssub.s32 768, %s1447
          %1450 = vsyncadd %s1436, %s1449
          %p1451 = scmp.ne.s32.totalorder 0, %s1447
          %s1452 = smul.addr %s33, 9
          %s1453 = sadd.s32 %s1443, %s1452
          %s1454 = smul.addr %s1453, 128
          %s1455 = scalar_lea.hbm %s9, %s1454
          %s1456 = smul.u32 %s1446, 8
          %s1457 = smul.u32 %s1456, 3
          %s1458 = sshll.u32 %s1439, 4
          %s1459 = int_to_ptr.vmem [resolvable:$true] %s1458
          %s1460 = sshll.u32 %s1457, 4
          %1464 = dma.vmem_to_hbm [thread:$0]  (%p1451), %s1459, %s1460, %s1455, %s1436, 256, 384, %s1456
        $region134: #{tpu_custom_call.1} parent=117 // pred_fallthru
          _
      $region118: #{tpu_custom_call.1} parent=5 // pred_fallthru
        _
      %p1465 = scmp.le.s32.totalorder 2, %s24
      // Predicated region
      $region135: #{tpu_custom_call.1} parent=5 // pred_check
        %p1466 = pneg %p1465
      $region136: #{tpu_custom_call.1} parent=5 // pred_check_branch
        %1468 = sbr.rel (%p1466) target = $region138
      $region137: #{tpu_custom_call.1} parent=5 // pred_region
        %s1469 = ssub.s32 %s24, 2
        // Predicated region
        $region139: #{tpu_custom_call.1} parent=137 // pred_check
          %p1470 = pneg %p293
        $region140: #{tpu_custom_call.1} parent=137 // pred_check_branch
          %1472 = sbr.rel (%p1470) target = $region142
        $region141: #{tpu_custom_call.1} parent=137 // pred_region
          %s1473 = sand.u32 %s278, 1
          %s1474 = scalar_lea.sflag [#allocation5], %s1473
          %s1475 = sand.u32 %s278, 1
          %s1476 = smul.addr %s1475, 48
          %s1477 = scalar_lea.vmem [#allocation8], %s1476
          %1478 = dma.done %s1474, 768
        $region142: #{tpu_custom_call.1} parent=137 // pred_fallthru
          _
      $region138: #{tpu_custom_call.1} parent=5 // pred_fallthru
        _
    $region6: #{tpu_custom_call.1} parent=1 // loop_footer
      %s28 = sadd.s32 1, %s24
    $region7: #{tpu_custom_call.1} parent=1 // loop_footer_branch
      %23 = sbr.rel target = $region3
    $region8: #{tpu_custom_call.1} parent=1 // loop_exit
      _
    %1479 = vsyncpa [#allocation4], 1
    %s1480 = scalar_lea.sflag [#allocation4], 1
    %1481 = vsyncpa %s1480, 1
    %1482 = vsyncpa [#allocation7], 1
    %s1483 = scalar_lea.sflag [#allocation7], 1
    %1484 = vsyncpa %s1483, 1
    %1485 = vsyncpa [#allocation5], 1
    %s1486 = scalar_lea.sflag [#allocation5], 1
    %1487 = vsyncpa %s1486, 1

</llo_original>
